<compile_context>
chip_gen: v5e
topology: v5e:2x2
jax: 0.10.0
libtpu: 0.0.40
codegen_flags: <defaults>
</compile_context>

<pallas_src>
import jax
import jax.numpy as jnp
import numpy as np
from jax.experimental import pallas as pl
from jax.experimental.pallas import tpu as pltpu


def _transition_kernel(x_ref, w_ref, b_ref, o_ref, xsum_ref):
    # x_ref:    (r_tile, 2, W, Cin)   -- the two input image rows feeding one output row,
    #                                    channels minor (lane dim)
    # w_ref:    (Cin, Cout_pad)       -- 1x1 conv weight with BN scale and 0.25 folded in
    # b_ref:    (1, Cout_pad)         -- BN shift folded through the conv (f32)
    # o_ref:    (r_tile, Wo, Cout_pad)
    # xsum_ref: (r_tile*Wo, Cin)      -- VMEM scratch holding the 2x2-window sums
    r_tile, wo_n = o_ref.shape[0], o_ref.shape[1]

    # Pool first: sum the 2x2 window of every output pixel (cheap VPU adds).
    for wo in range(wo_n):  # static unroll over output columns
        s = (x_ref[:, 0, 2 * wo, :] + x_ref[:, 0, 2 * wo + 1, :]
             + x_ref[:, 1, 2 * wo, :] + x_ref[:, 1, 2 * wo + 1, :])
        xsum_ref[wo * r_tile:(wo + 1) * r_tile, :] = s

    # One MXU matmul for the whole tile (BN + conv + avg-pool scaling all folded in).
    y = jnp.dot(xsum_ref[...], w_ref[...],
                preferred_element_type=jnp.float32) + b_ref[...]

    for wo in range(wo_n):
        o_ref[:, wo, :] = y[wo * r_tile:(wo + 1) * r_tile, :].astype(o_ref.dtype)


def _pick_r_tile(r, width, cin, wo, cout_pad, itemsize, m_tile, budget_bytes):
    """Rows (of output) per grid step: aim for ~m_tile output pixels, capped by VMEM."""
    def used(rt):
        x_blk = rt * 2 * width * cin * itemsize      # input block (double-buffered)
        o_blk = rt * wo * cout_pad * 4               # output block (double-buffered, f32)
        xsum = rt * wo * cin * itemsize              # pooled-sum scratch
        y_tmp = rt * wo * cout_pad * 4               # matmul result temporary
        wgt = cin * cout_pad * itemsize + cout_pad * 4
        return 2 * x_blk + 2 * o_blk + xsum + y_tmp + wgt

    rt = min(r, max(1, m_tile // max(1, wo)))
    if rt >= 8:
        rt = (rt // 8) * 8                           # keep matmul/store slabs sublane-aligned
    while rt > 8 and used(rt) > budget_bytes:
        rt = max(8, ((rt // 2) // 8) * 8)
    return rt


def transition_forward(x_nchw, gamma, beta, running_mean, running_var, conv_w, *,
                       eps=1e-5, compute_dtype=jnp.bfloat16, m_tile=1024,
                       vmem_limit_bytes=48 * 1024 * 1024):
    """DenseNet Transition forward.  x_nchw: (N, Cin, H, W); conv_w: (Cout, Cin, 1, 1)."""
    n, cin, h, w = x_nchw.shape
    cout = conv_w.shape[0]
    # TODO(synk): PyTorch BatchNorm2d in training mode uses batch statistics; this is the
    # standard inference-mode BN with running stats (module.eval()).
    # TODO(synk): odd H/W (AvgPool2d floor truncation) is not handled; even spatial dims assumed.
    assert h % 2 == 0 and w % 2 == 0, "even spatial dims required"
    ho, wo = h // 2, w // 2
    r = n * ho
    cout_pad = ((cout + 127) // 128) * 128           # lane-dense output stores

    # ---- fold BN (inference) and the 0.25 avg-pool factor into weight + bias (O(Cin*Cout)) ----
    scale = (gamma / jnp.sqrt(running_var + eps)).astype(jnp.float32)     # (Cin,)
    shift = (beta - running_mean * scale).astype(jnp.float32)             # (Cin,)
    w_mat = conv_w.reshape(cout, cin).T.astype(jnp.float32)               # (Cin, Cout)
    w_fold = (0.25 * scale)[:, None] * w_mat                              # (Cin, Cout)
    bias = jnp.sum(shift[:, None] * w_mat, axis=0)                        # (Cout,), exact f32
    w_p = jnp.zeros((cin, cout_pad), jnp.float32).at[:, :cout].set(w_fold).astype(compute_dtype)
    b_p = jnp.zeros((1, cout_pad), jnp.float32).at[:, :cout].set(bias[None, :])

    # ---- layout: one NCHW->NHWC transpose pass, then a FREE reshape (no window transpose) ----
    x_rows = jnp.transpose(x_nchw, (0, 2, 3, 1)).reshape(r, 2, w, cin).astype(compute_dtype)

    itemsize = jnp.dtype(compute_dtype).itemsize
    r_tile = _pick_r_tile(r, w, cin, wo, cout_pad, itemsize, m_tile,
                          budget_bytes=24 * 1024 * 1024)
    grid = (pl.cdiv(r, r_tile),)                     # no divisibility requirement

    out_p = pl.pallas_call(
        _transition_kernel,
        out_shape=jax.ShapeDtypeStruct((r, wo, cout_pad), x_nchw.dtype),
        grid_spec=pltpu.PrefetchScalarGridSpec(
            num_scalar_prefetch=0,
            grid=grid,
            in_specs=[
                pl.BlockSpec((r_tile, 2, w, cin), lambda i: (i, 0, 0, 0)),
                pl.BlockSpec((cin, cout_pad), lambda i: (0, 0)),
                pl.BlockSpec((1, cout_pad), lambda i: (0, 0)),
            ],
            out_specs=pl.BlockSpec((r_tile, wo, cout_pad), lambda i: (i, 0, 0)),
            scratch_shapes=[pltpu.VMEM((r_tile * wo, cin), compute_dtype)],
        ),
        compiler_params=pltpu.CompilerParams(
            dimension_semantics=("parallel",),
            vmem_limit_bytes=vmem_limit_bytes),
    )(x_rows, w_p, b_p)

    out = out_p[:, :, :cout].reshape(n, ho, wo, cout)
    return jnp.transpose(out, (0, 3, 1, 2))          # NCHW (N, Cout, Ho, Wo)


def _reference(x, gamma, beta, mean, var, conv_w, eps=1e-5):
    xn = (x - mean[None, :, None, None]) / jnp.sqrt(var[None, :, None, None] + eps)
    xn = xn * gamma[None, :, None, None] + beta[None, :, None, None]
    y = jnp.einsum('nchw,oc->nohw', xn, conv_w.reshape(conv_w.shape[0], conv_w.shape[1]))
    n, o, hh, ww = y.shape
    return y.reshape(n, o, hh // 2, 2, ww // 2, 2).mean(axis=(3, 5))


if __name__ == "__main__":
    key = jax.random.PRNGKey(0)
    k_x, k_g, k_b, k_m, k_v, k_w = jax.random.split(key, 6)

    N, Cin, H, W = 2, 4, 16, 16
    Cout = 2  # DenseNet transition typically halves channels

    x = jax.random.normal(k_x, (N, Cin, H, W), dtype=jnp.float32)
    gamma = jax.random.normal(k_g, (Cin,), dtype=jnp.float32) * 0.1 + 1.0
    beta = jax.random.normal(k_b, (Cin,), dtype=jnp.float32) * 0.1
    running_mean = jax.random.normal(k_m, (Cin,), dtype=jnp.float32) * 0.1
    running_var = jnp.abs(jax.random.normal(k_v, (Cin,), dtype=jnp.float32)) * 0.5 + 0.5
    conv_w = jax.random.normal(k_w, (Cout, Cin, 1, 1), dtype=jnp.float32) * 0.1

    ref = _reference(x, gamma, beta, running_mean, running_var, conv_w)

    # f32 compute path: matches the reference to fp-reassociation precision.
    out_f32 = jax.block_until_ready(
        transition_forward(x, gamma, beta, running_mean, running_var, conv_w,
                           compute_dtype=jnp.float32))
    assert out_f32.shape == (N, Cout, H // 2, W // 2), out_f32.shape
    np.testing.assert_allclose(np.asarray(out_f32), np.asarray(ref), rtol=1e-5, atol=1e-5)

    # bf16 compute path (default): halves HBM traffic; looser tolerance.
    out_bf16 = jax.block_until_ready(
        transition_forward(x, gamma, beta, running_mean, running_var, conv_w))
    assert out_bf16.shape == (N, Cout, H // 2, W // 2), out_bf16.shape
    np.testing.assert_allclose(np.asarray(out_bf16), np.asarray(ref), rtol=5e-2, atol=5e-2)

    print("KERNEL_OK")
</pallas_src>

<mosaic_0001>
module attributes {stable_mosaic.version = 11 : i64} {
  func.func @_transition_kernel(%arg0: i32, %arg1: memref<16x2x16x4xf32, #tpu.memory_space<vmem>>, %arg2: memref<4x128xf32, #tpu.memory_space<vmem>>, %arg3: memref<1x128xf32, #tpu.memory_space<vmem>>, %arg4: memref<16x8x128xf32, #tpu.memory_space<vmem>>, %arg5: memref<128x4xf32, #tpu.memory_space<vmem>>) attributes {dimension_semantics = [#tpu.dimension_semantics<parallel>], iteration_bounds = array<i64: 1>, scalar_prefetch = 0 : i64, scratch_operands = 1 : i64, tpu.core_type = #tpu.core_type<tc>, window_params = [{transform_indices = @transform_0, window_bounds = array<i64: 16, 2, 16, 4>}, {pipeline_mode = #tpu.pipeline_mode<synchronous>, transform_indices = @transform_1, window_bounds = array<i64: 4, 128>}, {pipeline_mode = #tpu.pipeline_mode<synchronous>, transform_indices = @transform_2, window_bounds = array<i64: 1, 128>}, {transform_indices = @transform_3, window_bounds = array<i64: 16, 8, 128>}]} {
    %c0 = arith.constant 0 : index
    %c0_0 = arith.constant 0 : index
    %c0_1 = arith.constant 0 : index
    %c0_2 = arith.constant 0 : index
    %0 = vector.load %arg1[%c0, %c0_0, %c0_1, %c0_2] : memref<16x2x16x4xf32, #tpu.memory_space<vmem>>, vector<16x1x1x4xf32>
    %1 = vector.shape_cast %0 : vector<16x1x1x4xf32> to vector<16x4xf32>
    %c0_3 = arith.constant 0 : index
    %c0_4 = arith.constant 0 : index
    %c1 = arith.constant 1 : index
    %c0_5 = arith.constant 0 : index
    %2 = vector.load %arg1[%c0_3, %c0_4, %c1, %c0_5] : memref<16x2x16x4xf32, #tpu.memory_space<vmem>>, vector<16x1x1x4xf32>
    %3 = vector.shape_cast %2 : vector<16x1x1x4xf32> to vector<16x4xf32>
    %4 = arith.addf %1, %3 : vector<16x4xf32>
    %c0_6 = arith.constant 0 : index
    %c1_7 = arith.constant 1 : index
    %c0_8 = arith.constant 0 : index
    %c0_9 = arith.constant 0 : index
    %5 = vector.load %arg1[%c0_6, %c1_7, %c0_8, %c0_9] : memref<16x2x16x4xf32, #tpu.memory_space<vmem>>, vector<16x1x1x4xf32>
    %6 = vector.shape_cast %5 : vector<16x1x1x4xf32> to vector<16x4xf32>
    %7 = arith.addf %4, %6 : vector<16x4xf32>
    %c0_10 = arith.constant 0 : index
    %c1_11 = arith.constant 1 : index
    %c1_12 = arith.constant 1 : index
    %c0_13 = arith.constant 0 : index
    %8 = vector.load %arg1[%c0_10, %c1_11, %c1_12, %c0_13] : memref<16x2x16x4xf32, #tpu.memory_space<vmem>>, vector<16x1x1x4xf32>
    %9 = vector.shape_cast %8 : vector<16x1x1x4xf32> to vector<16x4xf32>
    %10 = arith.addf %7, %9 : vector<16x4xf32>
    %c0_14 = arith.constant 0 : index
    %c0_15 = arith.constant 0 : index
    %11 = vector.load %arg5[%c0_14, %c0_15] : memref<128x4xf32, #tpu.memory_space<vmem>>, vector<16x4xf32>
    tpu.vector_store %arg5[%c0_14, %c0_15], %10 {strides = array<i32>} : memref<128x4xf32, #tpu.memory_space<vmem>>, vector<16x4xf32>,
    %c0_16 = arith.constant 0 : index
    %c0_17 = arith.constant 0 : index
    %c2 = arith.constant 2 : index
    %c0_18 = arith.constant 0 : index
    %12 = vector.load %arg1[%c0_16, %c0_17, %c2, %c0_18] : memref<16x2x16x4xf32, #tpu.memory_space<vmem>>, vector<16x1x1x4xf32>
    %13 = vector.shape_cast %12 : vector<16x1x1x4xf32> to vector<16x4xf32>
    %c0_19 = arith.constant 0 : index
    %c0_20 = arith.constant 0 : index
    %c3 = arith.constant 3 : index
    %c0_21 = arith.constant 0 : index
    %14 = vector.load %arg1[%c0_19, %c0_20, %c3, %c0_21] : memref<16x2x16x4xf32, #tpu.memory_space<vmem>>, vector<16x1x1x4xf32>
    %15 = vector.shape_cast %14 : vector<16x1x1x4xf32> to vector<16x4xf32>
    %16 = arith.addf %13, %15 : vector<16x4xf32>
    %c0_22 = arith.constant 0 : index
    %c1_23 = arith.constant 1 : index
    %c2_24 = arith.constant 2 : index
    %c0_25 = arith.constant 0 : index
    %17 = vector.load %arg1[%c0_22, %c1_23, %c2_24, %c0_25] : memref<16x2x16x4xf32, #tpu.memory_space<vmem>>, vector<16x1x1x4xf32>
    %18 = vector.shape_cast %17 : vector<16x1x1x4xf32> to vector<16x4xf32>
    %19 = arith.addf %16, %18 : vector<16x4xf32>
    %c0_26 = arith.constant 0 : index
    %c1_27 = arith.constant 1 : index
    %c3_28 = arith.constant 3 : index
    %c0_29 = arith.constant 0 : index
    %20 = vector.load %arg1[%c0_26, %c1_27, %c3_28, %c0_29] : memref<16x2x16x4xf32, #tpu.memory_space<vmem>>, vector<16x1x1x4xf32>
    %21 = vector.shape_cast %20 : vector<16x1x1x4xf32> to vector<16x4xf32>
    %22 = arith.addf %19, %21 : vector<16x4xf32>
    %c16 = arith.constant 16 : index
    %c0_30 = arith.constant 0 : index
    %23 = vector.load %arg5[%c16, %c0_30] : memref<128x4xf32, #tpu.memory_space<vmem>>, vector<16x4xf32>
    tpu.vector_store %arg5[%c16, %c0_30], %22 {strides = array<i32>} : memref<128x4xf32, #tpu.memory_space<vmem>>, vector<16x4xf32>,
    %c0_31 = arith.constant 0 : index
    %c0_32 = arith.constant 0 : index
    %c4 = arith.constant 4 : index
    %c0_33 = arith.constant 0 : index
    %24 = vector.load %arg1[%c0_31, %c0_32, %c4, %c0_33] : memref<16x2x16x4xf32, #tpu.memory_space<vmem>>, vector<16x1x1x4xf32>
    %25 = vector.shape_cast %24 : vector<16x1x1x4xf32> to vector<16x4xf32>
    %c0_34 = arith.constant 0 : index
    %c0_35 = arith.constant 0 : index
    %c5 = arith.constant 5 : index
    %c0_36 = arith.constant 0 : index
    %26 = vector.load %arg1[%c0_34, %c0_35, %c5, %c0_36] : memref<16x2x16x4xf32, #tpu.memory_space<vmem>>, vector<16x1x1x4xf32>
    %27 = vector.shape_cast %26 : vector<16x1x1x4xf32> to vector<16x4xf32>
    %28 = arith.addf %25, %27 : vector<16x4xf32>
    %c0_37 = arith.constant 0 : index
    %c1_38 = arith.constant 1 : index
    %c4_39 = arith.constant 4 : index
    %c0_40 = arith.constant 0 : index
    %29 = vector.load %arg1[%c0_37, %c1_38, %c4_39, %c0_40] : memref<16x2x16x4xf32, #tpu.memory_space<vmem>>, vector<16x1x1x4xf32>
    %30 = vector.shape_cast %29 : vector<16x1x1x4xf32> to vector<16x4xf32>
    %31 = arith.addf %28, %30 : vector<16x4xf32>
    %c0_41 = arith.constant 0 : index
    %c1_42 = arith.constant 1 : index
    %c5_43 = arith.constant 5 : index
    %c0_44 = arith.constant 0 : index
    %32 = vector.load %arg1[%c0_41, %c1_42, %c5_43, %c0_44] : memref<16x2x16x4xf32, #tpu.memory_space<vmem>>, vector<16x1x1x4xf32>
    %33 = vector.shape_cast %32 : vector<16x1x1x4xf32> to vector<16x4xf32>
    %34 = arith.addf %31, %33 : vector<16x4xf32>
    %c32 = arith.constant 32 : index
    %c0_45 = arith.constant 0 : index
    %35 = vector.load %arg5[%c32, %c0_45] : memref<128x4xf32, #tpu.memory_space<vmem>>, vector<16x4xf32>
    tpu.vector_store %arg5[%c32, %c0_45], %34 {strides = array<i32>} : memref<128x4xf32, #tpu.memory_space<vmem>>, vector<16x4xf32>,
    %c0_46 = arith.constant 0 : index
    %c0_47 = arith.constant 0 : index
    %c6 = arith.constant 6 : index
    %c0_48 = arith.constant 0 : index
    %36 = vector.load %arg1[%c0_46, %c0_47, %c6, %c0_48] : memref<16x2x16x4xf32, #tpu.memory_space<vmem>>, vector<16x1x1x4xf32>
    %37 = vector.shape_cast %36 : vector<16x1x1x4xf32> to vector<16x4xf32>
    %c0_49 = arith.constant 0 : index
    %c0_50 = arith.constant 0 : index
    %c7 = arith.constant 7 : index
    %c0_51 = arith.constant 0 : index
    %38 = vector.load %arg1[%c0_49, %c0_50, %c7, %c0_51] : memref<16x2x16x4xf32, #tpu.memory_space<vmem>>, vector<16x1x1x4xf32>
    %39 = vector.shape_cast %38 : vector<16x1x1x4xf32> to vector<16x4xf32>
    %40 = arith.addf %37, %39 : vector<16x4xf32>
    %c0_52 = arith.constant 0 : index
    %c1_53 = arith.constant 1 : index
    %c6_54 = arith.constant 6 : index
    %c0_55 = arith.constant 0 : index
    %41 = vector.load %arg1[%c0_52, %c1_53, %c6_54, %c0_55] : memref<16x2x16x4xf32, #tpu.memory_space<vmem>>, vector<16x1x1x4xf32>
    %42 = vector.shape_cast %41 : vector<16x1x1x4xf32> to vector<16x4xf32>
    %43 = arith.addf %40, %42 : vector<16x4xf32>
    %c0_56 = arith.constant 0 : index
    %c1_57 = arith.constant 1 : index
    %c7_58 = arith.constant 7 : index
    %c0_59 = arith.constant 0 : index
    %44 = vector.load %arg1[%c0_56, %c1_57, %c7_58, %c0_59] : memref<16x2x16x4xf32, #tpu.memory_space<vmem>>, vector<16x1x1x4xf32>
    %45 = vector.shape_cast %44 : vector<16x1x1x4xf32> to vector<16x4xf32>
    %46 = arith.addf %43, %45 : vector<16x4xf32>
    %c48 = arith.constant 48 : index
    %c0_60 = arith.constant 0 : index
    %47 = vector.load %arg5[%c48, %c0_60] : memref<128x4xf32, #tpu.memory_space<vmem>>, vector<16x4xf32>
    tpu.vector_store %arg5[%c48, %c0_60], %46 {strides = array<i32>} : memref<128x4xf32, #tpu.memory_space<vmem>>, vector<16x4xf32>,
    %c0_61 = arith.constant 0 : index
    %c0_62 = arith.constant 0 : index
    %c8 = arith.constant 8 : index
    %c0_63 = arith.constant 0 : index
    %48 = vector.load %arg1[%c0_61, %c0_62, %c8, %c0_63] : memref<16x2x16x4xf32, #tpu.memory_space<vmem>>, vector<16x1x1x4xf32>
    %49 = vector.shape_cast %48 : vector<16x1x1x4xf32> to vector<16x4xf32>
    %c0_64 = arith.constant 0 : index
    %c0_65 = arith.constant 0 : index
    %c9 = arith.constant 9 : index
    %c0_66 = arith.constant 0 : index
    %50 = vector.load %arg1[%c0_64, %c0_65, %c9, %c0_66] : memref<16x2x16x4xf32, #tpu.memory_space<vmem>>, vector<16x1x1x4xf32>
    %51 = vector.shape_cast %50 : vector<16x1x1x4xf32> to vector<16x4xf32>
    %52 = arith.addf %49, %51 : vector<16x4xf32>
    %c0_67 = arith.constant 0 : index
    %c1_68 = arith.constant 1 : index
    %c8_69 = arith.constant 8 : index
    %c0_70 = arith.constant 0 : index
    %53 = vector.load %arg1[%c0_67, %c1_68, %c8_69, %c0_70] : memref<16x2x16x4xf32, #tpu.memory_space<vmem>>, vector<16x1x1x4xf32>
    %54 = vector.shape_cast %53 : vector<16x1x1x4xf32> to vector<16x4xf32>
    %55 = arith.addf %52, %54 : vector<16x4xf32>
    %c0_71 = arith.constant 0 : index
    %c1_72 = arith.constant 1 : index
    %c9_73 = arith.constant 9 : index
    %c0_74 = arith.constant 0 : index
    %56 = vector.load %arg1[%c0_71, %c1_72, %c9_73, %c0_74] : memref<16x2x16x4xf32, #tpu.memory_space<vmem>>, vector<16x1x1x4xf32>
    %57 = vector.shape_cast %56 : vector<16x1x1x4xf32> to vector<16x4xf32>
    %58 = arith.addf %55, %57 : vector<16x4xf32>
    %c64 = arith.constant 64 : index
    %c0_75 = arith.constant 0 : index
    %59 = vector.load %arg5[%c64, %c0_75] : memref<128x4xf32, #tpu.memory_space<vmem>>, vector<16x4xf32>
    tpu.vector_store %arg5[%c64, %c0_75], %58 {strides = array<i32>} : memref<128x4xf32, #tpu.memory_space<vmem>>, vector<16x4xf32>,
    %c0_76 = arith.constant 0 : index
    %c0_77 = arith.constant 0 : index
    %c10 = arith.constant 10 : index
    %c0_78 = arith.constant 0 : index
    %60 = vector.load %arg1[%c0_76, %c0_77, %c10, %c0_78] : memref<16x2x16x4xf32, #tpu.memory_space<vmem>>, vector<16x1x1x4xf32>
    %61 = vector.shape_cast %60 : vector<16x1x1x4xf32> to vector<16x4xf32>
    %c0_79 = arith.constant 0 : index
    %c0_80 = arith.constant 0 : index
    %c11 = arith.constant 11 : index
    %c0_81 = arith.constant 0 : index
    %62 = vector.load %arg1[%c0_79, %c0_80, %c11, %c0_81] : memref<16x2x16x4xf32, #tpu.memory_space<vmem>>, vector<16x1x1x4xf32>
    %63 = vector.shape_cast %62 : vector<16x1x1x4xf32> to vector<16x4xf32>
    %64 = arith.addf %61, %63 : vector<16x4xf32>
    %c0_82 = arith.constant 0 : index
    %c1_83 = arith.constant 1 : index
    %c10_84 = arith.constant 10 : index
    %c0_85 = arith.constant 0 : index
    %65 = vector.load %arg1[%c0_82, %c1_83, %c10_84, %c0_85] : memref<16x2x16x4xf32, #tpu.memory_space<vmem>>, vector<16x1x1x4xf32>
    %66 = vector.shape_cast %65 : vector<16x1x1x4xf32> to vector<16x4xf32>
    %67 = arith.addf %64, %66 : vector<16x4xf32>
    %c0_86 = arith.constant 0 : index
    %c1_87 = arith.constant 1 : index
    %c11_88 = arith.constant 11 : index
    %c0_89 = arith.constant 0 : index
    %68 = vector.load %arg1[%c0_86, %c1_87, %c11_88, %c0_89] : memref<16x2x16x4xf32, #tpu.memory_space<vmem>>, vector<16x1x1x4xf32>
    %69 = vector.shape_cast %68 : vector<16x1x1x4xf32> to vector<16x4xf32>
    %70 = arith.addf %67, %69 : vector<16x4xf32>
    %c80 = arith.constant 80 : index
    %c0_90 = arith.constant 0 : index
    %71 = vector.load %arg5[%c80, %c0_90] : memref<128x4xf32, #tpu.memory_space<vmem>>, vector<16x4xf32>
    tpu.vector_store %arg5[%c80, %c0_90], %70 {strides = array<i32>} : memref<128x4xf32, #tpu.memory_space<vmem>>, vector<16x4xf32>,
    %c0_91 = arith.constant 0 : index
    %c0_92 = arith.constant 0 : index
    %c12 = arith.constant 12 : index
    %c0_93 = arith.constant 0 : index
    %72 = vector.load %arg1[%c0_91, %c0_92, %c12, %c0_93] : memref<16x2x16x4xf32, #tpu.memory_space<vmem>>, vector<16x1x1x4xf32>
    %73 = vector.shape_cast %72 : vector<16x1x1x4xf32> to vector<16x4xf32>
    %c0_94 = arith.constant 0 : index
    %c0_95 = arith.constant 0 : index
    %c13 = arith.constant 13 : index
    %c0_96 = arith.constant 0 : index
    %74 = vector.load %arg1[%c0_94, %c0_95, %c13, %c0_96] : memref<16x2x16x4xf32, #tpu.memory_space<vmem>>, vector<16x1x1x4xf32>
    %75 = vector.shape_cast %74 : vector<16x1x1x4xf32> to vector<16x4xf32>
    %76 = arith.addf %73, %75 : vector<16x4xf32>
    %c0_97 = arith.constant 0 : index
    %c1_98 = arith.constant 1 : index
    %c12_99 = arith.constant 12 : index
    %c0_100 = arith.constant 0 : index
    %77 = vector.load %arg1[%c0_97, %c1_98, %c12_99, %c0_100] : memref<16x2x16x4xf32, #tpu.memory_space<vmem>>, vector<16x1x1x4xf32>
    %78 = vector.shape_cast %77 : vector<16x1x1x4xf32> to vector<16x4xf32>
    %79 = arith.addf %76, %78 : vector<16x4xf32>
    %c0_101 = arith.constant 0 : index
    %c1_102 = arith.constant 1 : index
    %c13_103 = arith.constant 13 : index
    %c0_104 = arith.constant 0 : index
    %80 = vector.load %arg1[%c0_101, %c1_102, %c13_103, %c0_104] : memref<16x2x16x4xf32, #tpu.memory_space<vmem>>, vector<16x1x1x4xf32>
    %81 = vector.shape_cast %80 : vector<16x1x1x4xf32> to vector<16x4xf32>
    %82 = arith.addf %79, %81 : vector<16x4xf32>
    %c96 = arith.constant 96 : index
    %c0_105 = arith.constant 0 : index
    %83 = vector.load %arg5[%c96, %c0_105] : memref<128x4xf32, #tpu.memory_space<vmem>>, vector<16x4xf32>
    tpu.vector_store %arg5[%c96, %c0_105], %82 {strides = array<i32>} : memref<128x4xf32, #tpu.memory_space<vmem>>, vector<16x4xf32>,
    %c0_106 = arith.constant 0 : index
    %c0_107 = arith.constant 0 : index
    %c14 = arith.constant 14 : index
    %c0_108 = arith.constant 0 : index
    %84 = vector.load %arg1[%c0_106, %c0_107, %c14, %c0_108] : memref<16x2x16x4xf32, #tpu.memory_space<vmem>>, vector<16x1x1x4xf32>
    %85 = vector.shape_cast %84 : vector<16x1x1x4xf32> to vector<16x4xf32>
    %c0_109 = arith.constant 0 : index
    %c0_110 = arith.constant 0 : index
    %c15 = arith.constant 15 : index
    %c0_111 = arith.constant 0 : index
    %86 = vector.load %arg1[%c0_109, %c0_110, %c15, %c0_111] : memref<16x2x16x4xf32, #tpu.memory_space<vmem>>, vector<16x1x1x4xf32>
    %87 = vector.shape_cast %86 : vector<16x1x1x4xf32> to vector<16x4xf32>
    %88 = arith.addf %85, %87 : vector<16x4xf32>
    %c0_112 = arith.constant 0 : index
    %c1_113 = arith.constant 1 : index
    %c14_114 = arith.constant 14 : index
    %c0_115 = arith.constant 0 : index
    %89 = vector.load %arg1[%c0_112, %c1_113, %c14_114, %c0_115] : memref<16x2x16x4xf32, #tpu.memory_space<vmem>>, vector<16x1x1x4xf32>
    %90 = vector.shape_cast %89 : vector<16x1x1x4xf32> to vector<16x4xf32>
    %91 = arith.addf %88, %90 : vector<16x4xf32>
    %c0_116 = arith.constant 0 : index
    %c1_117 = arith.constant 1 : index
    %c15_118 = arith.constant 15 : index
    %c0_119 = arith.constant 0 : index
    %92 = vector.load %arg1[%c0_116, %c1_117, %c15_118, %c0_119] : memref<16x2x16x4xf32, #tpu.memory_space<vmem>>, vector<16x1x1x4xf32>
    %93 = vector.shape_cast %92 : vector<16x1x1x4xf32> to vector<16x4xf32>
    %94 = arith.addf %91, %93 : vector<16x4xf32>
    %c112 = arith.constant 112 : index
    %c0_120 = arith.constant 0 : index
    %95 = vector.load %arg5[%c112, %c0_120] : memref<128x4xf32, #tpu.memory_space<vmem>>, vector<16x4xf32>
    tpu.vector_store %arg5[%c112, %c0_120], %94 {strides = array<i32>} : memref<128x4xf32, #tpu.memory_space<vmem>>, vector<16x4xf32>,
    %c0_121 = arith.constant 0 : index
    %c0_122 = arith.constant 0 : index
    %96 = vector.load %arg5[%c0_121, %c0_122] : memref<128x4xf32, #tpu.memory_space<vmem>>, vector<128x4xf32>
    %c0_123 = arith.constant 0 : index
    %c0_124 = arith.constant 0 : index
    %97 = vector.load %arg2[%c0_123, %c0_124] : memref<4x128xf32, #tpu.memory_space<vmem>>, vector<4x128xf32>
    %cst = arith.constant dense<0.000000e+00> : vector<128x128xf32>
    %98 = tpu.matmul %96, %97, %cst {dimension_numbers = #tpu.dot_dimension_numbers<[1], [0], [0], [1], [0, 0, 1, 1], [], []>} : vector<128x4xf32>, vector<4x128xf32>, vector<128x128xf32> -> vector<128x128xf32>
    %c0_125 = arith.constant 0 : index
    %c0_126 = arith.constant 0 : index
    %99 = vector.load %arg3[%c0_125, %c0_126] : memref<1x128xf32, #tpu.memory_space<vmem>>, vector<1x128xf32>
    %100 = vector.broadcast %99 : vector<1x128xf32> to vector<128x128xf32>
    %101 = arith.addf %98, %100 : vector<128x128xf32>
    %102 = vector.extract_strided_slice %101 {offsets = [0, 0], sizes = [16, 128], strides = [1, 1]} : vector<128x128xf32> to vector<16x128xf32>
    %c0_127 = arith.constant 0 : index
    %c0_128 = arith.constant 0 : index
    %c0_129 = arith.constant 0 : index
    %103 = vector.load %arg4[%c0_127, %c0_128, %c0_129] : memref<16x8x128xf32, #tpu.memory_space<vmem>>, vector<16x1x128xf32>
    %104 = vector.shape_cast %103 : vector<16x1x128xf32> to vector<16x128xf32>
    %105 = vector.shape_cast %102 : vector<16x128xf32> to vector<16x1x128xf32>
    tpu.vector_store %arg4[%c0_127, %c0_128, %c0_129], %105 {strides = array<i32>} : memref<16x8x128xf32, #tpu.memory_space<vmem>>, vector<16x1x128xf32>,
    %106 = vector.extract_strided_slice %101 {offsets = [16, 0], sizes = [16, 128], strides = [1, 1]} : vector<128x128xf32> to vector<16x128xf32>
    %c0_130 = arith.constant 0 : index
    %c1_131 = arith.constant 1 : index
    %c0_132 = arith.constant 0 : index
    %107 = vector.load %arg4[%c0_130, %c1_131, %c0_132] : memref<16x8x128xf32, #tpu.memory_space<vmem>>, vector<16x1x128xf32>
    %108 = vector.shape_cast %107 : vector<16x1x128xf32> to vector<16x128xf32>
    %109 = vector.shape_cast %106 : vector<16x128xf32> to vector<16x1x128xf32>
    tpu.vector_store %arg4[%c0_130, %c1_131, %c0_132], %109 {strides = array<i32>} : memref<16x8x128xf32, #tpu.memory_space<vmem>>, vector<16x1x128xf32>,
    %110 = vector.extract_strided_slice %101 {offsets = [32, 0], sizes = [16, 128], strides = [1, 1]} : vector<128x128xf32> to vector<16x128xf32>
    %c0_133 = arith.constant 0 : index
    %c2_134 = arith.constant 2 : index
    %c0_135 = arith.constant 0 : index
    %111 = vector.load %arg4[%c0_133, %c2_134, %c0_135] : memref<16x8x128xf32, #tpu.memory_space<vmem>>, vector<16x1x128xf32>
    %112 = vector.shape_cast %111 : vector<16x1x128xf32> to vector<16x128xf32>
    %113 = vector.shape_cast %110 : vector<16x128xf32> to vector<16x1x128xf32>
    tpu.vector_store %arg4[%c0_133, %c2_134, %c0_135], %113 {strides = array<i32>} : memref<16x8x128xf32, #tpu.memory_space<vmem>>, vector<16x1x128xf32>,
    %114 = vector.extract_strided_slice %101 {offsets = [48, 0], sizes = [16, 128], strides = [1, 1]} : vector<128x128xf32> to vector<16x128xf32>
    %c0_136 = arith.constant 0 : index
    %c3_137 = arith.constant 3 : index
    %c0_138 = arith.constant 0 : index
    %115 = vector.load %arg4[%c0_136, %c3_137, %c0_138] : memref<16x8x128xf32, #tpu.memory_space<vmem>>, vector<16x1x128xf32>
    %116 = vector.shape_cast %115 : vector<16x1x128xf32> to vector<16x128xf32>
    %117 = vector.shape_cast %114 : vector<16x128xf32> to vector<16x1x128xf32>
    tpu.vector_store %arg4[%c0_136, %c3_137, %c0_138], %117 {strides = array<i32>} : memref<16x8x128xf32, #tpu.memory_space<vmem>>, vector<16x1x128xf32>,
    %118 = vector.extract_strided_slice %101 {offsets = [64, 0], sizes = [16, 128], strides = [1, 1]} : vector<128x128xf32> to vector<16x128xf32>
    %c0_139 = arith.constant 0 : index
    %c4_140 = arith.constant 4 : index
    %c0_141 = arith.constant 0 : index
    %119 = vector.load %arg4[%c0_139, %c4_140, %c0_141] : memref<16x8x128xf32, #tpu.memory_space<vmem>>, vector<16x1x128xf32>
    %120 = vector.shape_cast %119 : vector<16x1x128xf32> to vector<16x128xf32>
    %121 = vector.shape_cast %118 : vector<16x128xf32> to vector<16x1x128xf32>
    tpu.vector_store %arg4[%c0_139, %c4_140, %c0_141], %121 {strides = array<i32>} : memref<16x8x128xf32, #tpu.memory_space<vmem>>, vector<16x1x128xf32>,
    %122 = vector.extract_strided_slice %101 {offsets = [80, 0], sizes = [16, 128], strides = [1, 1]} : vector<128x128xf32> to vector<16x128xf32>
    %c0_142 = arith.constant 0 : index
    %c5_143 = arith.constant 5 : index
    %c0_144 = arith.constant 0 : index
    %123 = vector.load %arg4[%c0_142, %c5_143, %c0_144] : memref<16x8x128xf32, #tpu.memory_space<vmem>>, vector<16x1x128xf32>
    %124 = vector.shape_cast %123 : vector<16x1x128xf32> to vector<16x128xf32>
    %125 = vector.shape_cast %122 : vector<16x128xf32> to vector<16x1x128xf32>
    tpu.vector_store %arg4[%c0_142, %c5_143, %c0_144], %125 {strides = array<i32>} : memref<16x8x128xf32, #tpu.memory_space<vmem>>, vector<16x1x128xf32>,
    %126 = vector.extract_strided_slice %101 {offsets = [96, 0], sizes = [16, 128], strides = [1, 1]} : vector<128x128xf32> to vector<16x128xf32>
    %c0_145 = arith.constant 0 : index
    %c6_146 = arith.constant 6 : index
    %c0_147 = arith.constant 0 : index
    %127 = vector.load %arg4[%c0_145, %c6_146, %c0_147] : memref<16x8x128xf32, #tpu.memory_space<vmem>>, vector<16x1x128xf32>
    %128 = vector.shape_cast %127 : vector<16x1x128xf32> to vector<16x128xf32>
    %129 = vector.shape_cast %126 : vector<16x128xf32> to vector<16x1x128xf32>
    tpu.vector_store %arg4[%c0_145, %c6_146, %c0_147], %129 {strides = array<i32>} : memref<16x8x128xf32, #tpu.memory_space<vmem>>, vector<16x1x128xf32>,
    %130 = vector.extract_strided_slice %101 {offsets = [112, 0], sizes = [16, 128], strides = [1, 1]} : vector<128x128xf32> to vector<16x128xf32>
    %c0_148 = arith.constant 0 : index
    %c7_149 = arith.constant 7 : index
    %c0_150 = arith.constant 0 : index
    %131 = vector.load %arg4[%c0_148, %c7_149, %c0_150] : memref<16x8x128xf32, #tpu.memory_space<vmem>>, vector<16x1x128xf32>
    %132 = vector.shape_cast %131 : vector<16x1x128xf32> to vector<16x128xf32>
    %133 = vector.shape_cast %130 : vector<16x128xf32> to vector<16x1x128xf32>
    tpu.vector_store %arg4[%c0_148, %c7_149, %c0_150], %133 {strides = array<i32>} : memref<16x8x128xf32, #tpu.memory_space<vmem>>, vector<16x1x128xf32>,
    return
  }
  func.func @transform_0(%arg0: i32) -> (i32, i32, i32, i32) {
    %c0_i32 = arith.constant 0 : i32
    %c0_i32_0 = arith.constant 0 : i32
    %c0_i32_1 = arith.constant 0 : i32
    %c0_i32_2 = arith.constant 0 : i32
    return %arg0, %c0_i32, %c0_i32_0, %c0_i32_1 : i32, i32, i32, i32
  }
  func.func @transform_1(%arg0: i32) -> (i32, i32) {
    %c0_i32 = arith.constant 0 : i32
    %c0_i32_0 = arith.constant 0 : i32
    %c0_i32_1 = arith.constant 0 : i32
    return %c0_i32, %c0_i32_0 : i32, i32
  }
  func.func @transform_2(%arg0: i32) -> (i32, i32) {
    %c0_i32 = arith.constant 0 : i32
    %c0_i32_0 = arith.constant 0 : i32
    %c0_i32_1 = arith.constant 0 : i32
    return %c0_i32, %c0_i32_0 : i32, i32
  }
  func.func @transform_3(%arg0: i32) -> (i32, i32, i32) {
    %c0_i32 = arith.constant 0 : i32
    %c0_i32_0 = arith.constant 0 : i32
    %c0_i32_1 = arith.constant 0 : i32
    return %arg0, %c0_i32, %c0_i32_0 : i32, i32, i32
  }
}

</mosaic_0001>

<llo_original>
// kernel: tpu_custom_call.1
$region0: #{tpu_custom_call.1}
  #allocation0 [shape = 'u32[]', space=smem, size = 0x4, offset = 0x4, fixed_abs, tag = 'smem constant byte address 0x4 - core index']
  #allocation1 [shape = 'u32[72,128]{1,0:T(1,128)}', space=vmem, size = 0x9000, scoped, tag = 'internal scratch']
  #allocation2 [shape = 'f32[128,4]{1,0:T(8,128)}', space=vmem, size = 0x10000, scoped, tag = 'scratch operand']
  %s0 = inlined_call_operand.vmem [shape: f32[16,2,16,4], index: 0, kind: input, shape index: {}]
  %s1 = inlined_call_operand.vmem [shape: f32[4,128], index: 1, kind: input, shape index: {}]
  %s2 = inlined_call_operand.vmem [shape: f32[1,128], index: 2, kind: input, shape index: {}]
  %s3 = inlined_call_operand.hbm [shape: f32[16,8,128], index: 3, kind: output, shape index: {}]
  %s4 = sld [smem:[#allocation0]]
  $region22: #{tpu_custom_call.1} parent=0
    _
  %s6 = ssub.s32 1, %s4
  %s7 = scalar_select 0, %s6, %s4
  $region1: #{tpu_custom_call.1} parent=0
    #allocation3 [shape = 'u8[65536]{0}', space=vmem, size = 0x10000, scoped, tag = 'output window, operand 0, single buffered']
    #allocation4 [shape = 's32[1]{0}', space=sflag, size = 0x4, scoped, tag = 'scoped memory for tpu_custom_call.1']
    %8 = vsyncpa [#allocation4], 0
    // Predicated region
    $region2: #{tpu_custom_call.1} parent=1 // pred_check
      _
    $region3: #{tpu_custom_call.1} parent=1 // pred_check_branch
      %10 = sbr.rel (0) target = $region5
    $region4: #{tpu_custom_call.1} parent=1 // pred_region
      _
    $region5: #{tpu_custom_call.1} parent=1 // pred_fallthru
      _
    // Predicated region
    $region6: #{tpu_custom_call.1} parent=1 // pred_check
      _
    $region7: #{tpu_custom_call.1} parent=1 // pred_check_branch
      %12 = sbr.rel (0) target = $region9
    $region8: #{tpu_custom_call.1} parent=1 // pred_region
      _
    $region9: #{tpu_custom_call.1} parent=1 // pred_fallthru
      _
    // Predicated region
    $region10: #{tpu_custom_call.1} parent=1 // pred_check
      _
    $region11: #{tpu_custom_call.1} parent=1 // pred_check_branch
      %14 = sbr.rel (0) target = $region13
    $region12: #{tpu_custom_call.1} parent=1 // pred_region
      _
    $region13: #{tpu_custom_call.1} parent=1 // pred_fallthru
      _
    %v15 = vld [vmem:[%s0] sm:$0x1]
    %v16 = vld [vmem:[%s0 + $0x20] sm:$0x1]
    %v17 = vld [vmem:[%s0 + $0x40] sm:$0x1]
    %v18 = vld [vmem:[%s0 + $0x60] sm:$0x1]
    %v19 = vld [vmem:[%s0 + $0x80] sm:$0x1]
    %v20 = vld [vmem:[%s0 + $0xa0] sm:$0x1]
    %v21 = vld [vmem:[%s0 + $0xc0] sm:$0x1]
    %v22 = vld [vmem:[%s0 + $0xe0] sm:$0x1]
    %v23 = vld [vmem:[%s0 + $0x100] sm:$0x1]
    %v24 = vld [vmem:[%s0 + $0x120] sm:$0x1]
    %v25 = vld [vmem:[%s0 + $0x140] sm:$0x1]
    %v26 = vld [vmem:[%s0 + $0x160] sm:$0x1]
    %v27 = vld [vmem:[%s0 + $0x180] sm:$0x1]
    %v28 = vld [vmem:[%s0 + $0x1a0] sm:$0x1]
    %v29 = vld [vmem:[%s0 + $0x1c0] sm:$0x1]
    %v30 = vld [vmem:[%s0 + $0x1e0] sm:$0x1]
    %v31 = vld [vmem:[%s0 + $0x1] sm:$0x1]
    %v32 = vld [vmem:[%s0 + $0x21] sm:$0x1]
    %v33 = vld [vmem:[%s0 + $0x41] sm:$0x1]
    %v34 = vld [vmem:[%s0 + $0x61] sm:$0x1]
    %v35 = vld [vmem:[%s0 + $0x81] sm:$0x1]
    %v36 = vld [vmem:[%s0 + $0xa1] sm:$0x1]
    %v37 = vld [vmem:[%s0 + $0xc1] sm:$0x1]
    %v38 = vld [vmem:[%s0 + $0xe1] sm:$0x1]
    %v39 = vld [vmem:[%s0 + $0x101] sm:$0x1]
    %v40 = vld [vmem:[%s0 + $0x121] sm:$0x1]
    %v41 = vld [vmem:[%s0 + $0x141] sm:$0x1]
    %v42 = vld [vmem:[%s0 + $0x161] sm:$0x1]
    %v43 = vld [vmem:[%s0 + $0x181] sm:$0x1]
    %v44 = vld [vmem:[%s0 + $0x1a1] sm:$0x1]
    %v45 = vld [vmem:[%s0 + $0x1c1] sm:$0x1]
    %v46 = vld [vmem:[%s0 + $0x1e1] sm:$0x1]
    %v47 = vadd.f32 %v15, %v31
    %v48 = vadd.f32 %v16, %v32
    %v49 = vadd.f32 %v17, %v33
    %v50 = vadd.f32 %v18, %v34
    %v51 = vadd.f32 %v19, %v35
    %v52 = vadd.f32 %v20, %v36
    %v53 = vadd.f32 %v21, %v37
    %v54 = vadd.f32 %v22, %v38
    %v55 = vadd.f32 %v23, %v39
    %v56 = vadd.f32 %v24, %v40
    %v57 = vadd.f32 %v25, %v41
    %v58 = vadd.f32 %v26, %v42
    %v59 = vadd.f32 %v27, %v43
    %v60 = vadd.f32 %v28, %v44
    %v61 = vadd.f32 %v29, %v45
    %v62 = vadd.f32 %v30, %v46
    %s63 = scalar_lea.vmem %s0, 16
    %v64 = vld [vmem:[%s63] sm:$0x1]
    %v65 = vld [vmem:[%s63 + $0x20] sm:$0x1]
    %v66 = vld [vmem:[%s63 + $0x40] sm:$0x1]
    %v67 = vld [vmem:[%s63 + $0x60] sm:$0x1]
    %v68 = vld [vmem:[%s63 + $0x80] sm:$0x1]
    %v69 = vld [vmem:[%s63 + $0xa0] sm:$0x1]
    %v70 = vld [vmem:[%s63 + $0xc0] sm:$0x1]
    %v71 = vld [vmem:[%s63 + $0xe0] sm:$0x1]
    %v72 = vld [vmem:[%s63 + $0x100] sm:$0x1]
    %v73 = vld [vmem:[%s63 + $0x120] sm:$0x1]
    %v74 = vld [vmem:[%s63 + $0x140] sm:$0x1]
    %v75 = vld [vmem:[%s63 + $0x160] sm:$0x1]
    %v76 = vld [vmem:[%s63 + $0x180] sm:$0x1]
    %v77 = vld [vmem:[%s63 + $0x1a0] sm:$0x1]
    %v78 = vld [vmem:[%s63 + $0x1c0] sm:$0x1]
    %v79 = vld [vmem:[%s63 + $0x1e0] sm:$0x1]
    %v80 = vadd.f32 %v47, %v64
    %v81 = vadd.f32 %v48, %v65
    %v82 = vadd.f32 %v49, %v66
    %v83 = vadd.f32 %v50, %v67
    %v84 = vadd.f32 %v51, %v68
    %v85 = vadd.f32 %v52, %v69
    %v86 = vadd.f32 %v53, %v70
    %v87 = vadd.f32 %v54, %v71
    %v88 = vadd.f32 %v55, %v72
    %v89 = vadd.f32 %v56, %v73
    %v90 = vadd.f32 %v57, %v74
    %v91 = vadd.f32 %v58, %v75
    %v92 = vadd.f32 %v59, %v76
    %v93 = vadd.f32 %v60, %v77
    %v94 = vadd.f32 %v61, %v78
    %v95 = vadd.f32 %v62, %v79
    %v96 = vld [vmem:[%s63 + $0x1] sm:$0x1]
    %v97 = vld [vmem:[%s63 + $0x21] sm:$0x1]
    %v98 = vld [vmem:[%s63 + $0x41] sm:$0x1]
    %v99 = vld [vmem:[%s63 + $0x61] sm:$0x1]
    %v100 = vld [vmem:[%s63 + $0x81] sm:$0x1]
    %v101 = vld [vmem:[%s63 + $0xa1] sm:$0x1]
    %v102 = vld [vmem:[%s63 + $0xc1] sm:$0x1]
    %v103 = vld [vmem:[%s63 + $0xe1] sm:$0x1]
    %v104 = vld [vmem:[%s63 + $0x101] sm:$0x1]
    %v105 = vld [vmem:[%s63 + $0x121] sm:$0x1]
    %v106 = vld [vmem:[%s63 + $0x141] sm:$0x1]
    %v107 = vld [vmem:[%s63 + $0x161] sm:$0x1]
    %v108 = vld [vmem:[%s63 + $0x181] sm:$0x1]
    %v109 = vld [vmem:[%s63 + $0x1a1] sm:$0x1]
    %v110 = vld [vmem:[%s63 + $0x1c1] sm:$0x1]
    %v111 = vld [vmem:[%s63 + $0x1e1] sm:$0x1]
    %v112 = vadd.f32 %v80, %v96
    %v113 = vadd.f32 %v81, %v97
    %v114 = vadd.f32 %v82, %v98
    %v115 = vadd.f32 %v83, %v99
    %v116 = vadd.f32 %v84, %v100
    %v117 = vadd.f32 %v85, %v101
    %v118 = vadd.f32 %v86, %v102
    %v119 = vadd.f32 %v87, %v103
    %v120 = vadd.f32 %v88, %v104
    %v121 = vadd.f32 %v89, %v105
    %v122 = vadd.f32 %v90, %v106
    %v123 = vadd.f32 %v91, %v107
    %v124 = vadd.f32 %v92, %v108
    %v125 = vadd.f32 %v93, %v109
    %v126 = vadd.f32 %v94, %v110
    %v127 = vadd.f32 %v95, %v111
    %v144 = vrot.slane %v113, 7
    %vm145 = vcmask 1041409
    %v146 = vsel %vm145, %v144, %v112
    %v147 = vrot.slane %v114, 6
    %vm148 = vcmask 1042434
    %v149 = vsel %vm148, %v147, %v146
    %v150 = vrot.slane %v115, 5
    %vm151 = vcmask 1043459
    %v152 = vsel %vm151, %v150, %v149
    %v153 = vrot.slane %v116, 4
    %vm154 = vcmask 1044484
    %v155 = vsel %vm154, %v153, %v152
    %v156 = vrot.slane %v117, 3
    %vm157 = vcmask 1045509
    %v158 = vsel %vm157, %v156, %v155
    %v159 = vrot.slane %v118, 2
    %vm160 = vcmask 1046534
    %v161 = vsel %vm160, %v159, %v158
    %v162 = vrot.slane %v119, 1
    %vm163 = vcmask 1047559
    %v164 = vsel %vm163, %v162, %v161
    %v165 = vrot.slane %v121, 7
    %v166 = vsel %vm145, %v165, %v120
    %v167 = vrot.slane %v122, 6
    %v168 = vsel %vm148, %v167, %v166
    %v169 = vrot.slane %v123, 5
    %v170 = vsel %vm151, %v169, %v168
    %v171 = vrot.slane %v124, 4
    %v172 = vsel %vm154, %v171, %v170
    %v173 = vrot.slane %v125, 3
    %v174 = vsel %vm157, %v173, %v172
    %v175 = vrot.slane %v126, 2
    %v176 = vsel %vm160, %v175, %v174
    %v177 = vrot.slane %v127, 1
    %v178 = vsel %vm163, %v177, %v176
    %vm181 = vcmask 31744
    %182 = vst.msk [vmem:[#allocation2] sm:$0xff] %vm181, %v164
    %183 = vst.msk [vmem:[#allocation2 + $0x8] sm:$0xff] %vm181, %v178
    %v184 = vld [vmem:[%s0 + $0x2] sm:$0x1]
    %v185 = vld [vmem:[%s0 + $0x22] sm:$0x1]
    %v186 = vld [vmem:[%s0 + $0x42] sm:$0x1]
    %v187 = vld [vmem:[%s0 + $0x62] sm:$0x1]
    %v188 = vld [vmem:[%s0 + $0x82] sm:$0x1]
    %v189 = vld [vmem:[%s0 + $0xa2] sm:$0x1]
    %v190 = vld [vmem:[%s0 + $0xc2] sm:$0x1]
    %v191 = vld [vmem:[%s0 + $0xe2] sm:$0x1]
    %v192 = vld [vmem:[%s0 + $0x102] sm:$0x1]
    %v193 = vld [vmem:[%s0 + $0x122] sm:$0x1]
    %v194 = vld [vmem:[%s0 + $0x142] sm:$0x1]
    %v195 = vld [vmem:[%s0 + $0x162] sm:$0x1]
    %v196 = vld [vmem:[%s0 + $0x182] sm:$0x1]
    %v197 = vld [vmem:[%s0 + $0x1a2] sm:$0x1]
    %v198 = vld [vmem:[%s0 + $0x1c2] sm:$0x1]
    %v199 = vld [vmem:[%s0 + $0x1e2] sm:$0x1]
    %v200 = vld [vmem:[%s0 + $0x3] sm:$0x1]
    %v201 = vld [vmem:[%s0 + $0x23] sm:$0x1]
    %v202 = vld [vmem:[%s0 + $0x43] sm:$0x1]
    %v203 = vld [vmem:[%s0 + $0x63] sm:$0x1]
    %v204 = vld [vmem:[%s0 + $0x83] sm:$0x1]
    %v205 = vld [vmem:[%s0 + $0xa3] sm:$0x1]
    %v206 = vld [vmem:[%s0 + $0xc3] sm:$0x1]
    %v207 = vld [vmem:[%s0 + $0xe3] sm:$0x1]
    %v208 = vld [vmem:[%s0 + $0x103] sm:$0x1]
    %v209 = vld [vmem:[%s0 + $0x123] sm:$0x1]
    %v210 = vld [vmem:[%s0 + $0x143] sm:$0x1]
    %v211 = vld [vmem:[%s0 + $0x163] sm:$0x1]
    %v212 = vld [vmem:[%s0 + $0x183] sm:$0x1]
    %v213 = vld [vmem:[%s0 + $0x1a3] sm:$0x1]
    %v214 = vld [vmem:[%s0 + $0x1c3] sm:$0x1]
    %v215 = vld [vmem:[%s0 + $0x1e3] sm:$0x1]
    %v216 = vadd.f32 %v184, %v200
    %v217 = vadd.f32 %v185, %v201
    %v218 = vadd.f32 %v186, %v202
    %v219 = vadd.f32 %v187, %v203
    %v220 = vadd.f32 %v188, %v204
    %v221 = vadd.f32 %v189, %v205
    %v222 = vadd.f32 %v190, %v206
    %v223 = vadd.f32 %v191, %v207
    %v224 = vadd.f32 %v192, %v208
    %v225 = vadd.f32 %v193, %v209
    %v226 = vadd.f32 %v194, %v210
    %v227 = vadd.f32 %v195, %v211
    %v228 = vadd.f32 %v196, %v212
    %v229 = vadd.f32 %v197, %v213
    %v230 = vadd.f32 %v198, %v214
    %v231 = vadd.f32 %v199, %v215
    %v232 = vld [vmem:[%s63 + $0x2] sm:$0x1]
    %v233 = vld [vmem:[%s63 + $0x22] sm:$0x1]
    %v234 = vld [vmem:[%s63 + $0x42] sm:$0x1]
    %v235 = vld [vmem:[%s63 + $0x62] sm:$0x1]
    %v236 = vld [vmem:[%s63 + $0x82] sm:$0x1]
    %v237 = vld [vmem:[%s63 + $0xa2] sm:$0x1]
    %v238 = vld [vmem:[%s63 + $0xc2] sm:$0x1]
    %v239 = vld [vmem:[%s63 + $0xe2] sm:$0x1]
    %v240 = vld [vmem:[%s63 + $0x102] sm:$0x1]
    %v241 = vld [vmem:[%s63 + $0x122] sm:$0x1]
    %v242 = vld [vmem:[%s63 + $0x142] sm:$0x1]
    %v243 = vld [vmem:[%s63 + $0x162] sm:$0x1]
    %v244 = vld [vmem:[%s63 + $0x182] sm:$0x1]
    %v245 = vld [vmem:[%s63 + $0x1a2] sm:$0x1]
    %v246 = vld [vmem:[%s63 + $0x1c2] sm:$0x1]
    %v247 = vld [vmem:[%s63 + $0x1e2] sm:$0x1]
    %v248 = vadd.f32 %v216, %v232
    %v249 = vadd.f32 %v217, %v233
    %v250 = vadd.f32 %v218, %v234
    %v251 = vadd.f32 %v219, %v235
    %v252 = vadd.f32 %v220, %v236
    %v253 = vadd.f32 %v221, %v237
    %v254 = vadd.f32 %v222, %v238
    %v255 = vadd.f32 %v223, %v239
    %v256 = vadd.f32 %v224, %v240
    %v257 = vadd.f32 %v225, %v241
    %v258 = vadd.f32 %v226, %v242
    %v259 = vadd.f32 %v227, %v243
    %v260 = vadd.f32 %v228, %v244
    %v261 = vadd.f32 %v229, %v245
    %v262 = vadd.f32 %v230, %v246
    %v263 = vadd.f32 %v231, %v247
    %v264 = vld [vmem:[%s63 + $0x3] sm:$0x1]
    %v265 = vld [vmem:[%s63 + $0x23] sm:$0x1]
    %v266 = vld [vmem:[%s63 + $0x43] sm:$0x1]
    %v267 = vld [vmem:[%s63 + $0x63] sm:$0x1]
    %v268 = vld [vmem:[%s63 + $0x83] sm:$0x1]
    %v269 = vld [vmem:[%s63 + $0xa3] sm:$0x1]
    %v270 = vld [vmem:[%s63 + $0xc3] sm:$0x1]
    %v271 = vld [vmem:[%s63 + $0xe3] sm:$0x1]
    %v272 = vld [vmem:[%s63 + $0x103] sm:$0x1]
    %v273 = vld [vmem:[%s63 + $0x123] sm:$0x1]
    %v274 = vld [vmem:[%s63 + $0x143] sm:$0x1]
    %v275 = vld [vmem:[%s63 + $0x163] sm:$0x1]
    %v276 = vld [vmem:[%s63 + $0x183] sm:$0x1]
    %v277 = vld [vmem:[%s63 + $0x1a3] sm:$0x1]
    %v278 = vld [vmem:[%s63 + $0x1c3] sm:$0x1]
    %v279 = vld [vmem:[%s63 + $0x1e3] sm:$0x1]
    %v280 = vadd.f32 %v248, %v264
    %v281 = vadd.f32 %v249, %v265
    %v282 = vadd.f32 %v250, %v266
    %v283 = vadd.f32 %v251, %v267
    %v284 = vadd.f32 %v252, %v268
    %v285 = vadd.f32 %v253, %v269
    %v286 = vadd.f32 %v254, %v270
    %v287 = vadd.f32 %v255, %v271
    %v288 = vadd.f32 %v256, %v272
    %v289 = vadd.f32 %v257, %v273
    %v290 = vadd.f32 %v258, %v274
    %v291 = vadd.f32 %v259, %v275
    %v292 = vadd.f32 %v260, %v276
    %v293 = vadd.f32 %v261, %v277
    %v294 = vadd.f32 %v262, %v278
    %v295 = vadd.f32 %v263, %v279
    %v312 = vrot.slane %v281, 7
    %v313 = vsel %vm145, %v312, %v280
    %v314 = vrot.slane %v282, 6
    %v315 = vsel %vm148, %v314, %v313
    %v316 = vrot.slane %v283, 5
    %v317 = vsel %vm151, %v316, %v315
    %v318 = vrot.slane %v284, 4
    %v319 = vsel %vm154, %v318, %v317
    %v320 = vrot.slane %v285, 3
    %v321 = vsel %vm157, %v320, %v319
    %v322 = vrot.slane %v286, 2
    %v323 = vsel %vm160, %v322, %v321
    %v324 = vrot.slane %v287, 1
    %v325 = vsel %vm163, %v324, %v323
    %v326 = vrot.slane %v289, 7
    %v327 = vsel %vm145, %v326, %v288
    %v328 = vrot.slane %v290, 6
    %v329 = vsel %vm148, %v328, %v327
    %v330 = vrot.slane %v291, 5
    %v331 = vsel %vm151, %v330, %v329
    %v332 = vrot.slane %v292, 4
    %v333 = vsel %vm154, %v332, %v331
    %v334 = vrot.slane %v293, 3
    %v335 = vsel %vm157, %v334, %v333
    %v336 = vrot.slane %v294, 2
    %v337 = vsel %vm160, %v336, %v335
    %v338 = vrot.slane %v295, 1
    %v339 = vsel %vm163, %v338, %v337
    %342 = vst.msk [vmem:[#allocation2 + $0x10] sm:$0xff] %vm181, %v325
    %343 = vst.msk [vmem:[#allocation2 + $0x18] sm:$0xff] %vm181, %v339
    %v344 = vld [vmem:[%s0 + $0x4] sm:$0x1]
    %v345 = vld [vmem:[%s0 + $0x24] sm:$0x1]
    %v346 = vld [vmem:[%s0 + $0x44] sm:$0x1]
    %v347 = vld [vmem:[%s0 + $0x64] sm:$0x1]
    %v348 = vld [vmem:[%s0 + $0x84] sm:$0x1]
    %v349 = vld [vmem:[%s0 + $0xa4] sm:$0x1]
    %v350 = vld [vmem:[%s0 + $0xc4] sm:$0x1]
    %v351 = vld [vmem:[%s0 + $0xe4] sm:$0x1]
    %v352 = vld [vmem:[%s0 + $0x104] sm:$0x1]
    %v353 = vld [vmem:[%s0 + $0x124] sm:$0x1]
    %v354 = vld [vmem:[%s0 + $0x144] sm:$0x1]
    %v355 = vld [vmem:[%s0 + $0x164] sm:$0x1]
    %v356 = vld [vmem:[%s0 + $0x184] sm:$0x1]
    %v357 = vld [vmem:[%s0 + $0x1a4] sm:$0x1]
    %v358 = vld [vmem:[%s0 + $0x1c4] sm:$0x1]
    %v359 = vld [vmem:[%s0 + $0x1e4] sm:$0x1]
    %v360 = vld [vmem:[%s0 + $0x5] sm:$0x1]
    %v361 = vld [vmem:[%s0 + $0x25] sm:$0x1]
    %v362 = vld [vmem:[%s0 + $0x45] sm:$0x1]
    %v363 = vld [vmem:[%s0 + $0x65] sm:$0x1]
    %v364 = vld [vmem:[%s0 + $0x85] sm:$0x1]
    %v365 = vld [vmem:[%s0 + $0xa5] sm:$0x1]
    %v366 = vld [vmem:[%s0 + $0xc5] sm:$0x1]
    %v367 = vld [vmem:[%s0 + $0xe5] sm:$0x1]
    %v368 = vld [vmem:[%s0 + $0x105] sm:$0x1]
    %v369 = vld [vmem:[%s0 + $0x125] sm:$0x1]
    %v370 = vld [vmem:[%s0 + $0x145] sm:$0x1]
    %v371 = vld [vmem:[%s0 + $0x165] sm:$0x1]
    %v372 = vld [vmem:[%s0 + $0x185] sm:$0x1]
    %v373 = vld [vmem:[%s0 + $0x1a5] sm:$0x1]
    %v374 = vld [vmem:[%s0 + $0x1c5] sm:$0x1]
    %v375 = vld [vmem:[%s0 + $0x1e5] sm:$0x1]
    %v376 = vadd.f32 %v344, %v360
    %v377 = vadd.f32 %v345, %v361
    %v378 = vadd.f32 %v346, %v362
    %v379 = vadd.f32 %v347, %v363
    %v380 = vadd.f32 %v348, %v364
    %v381 = vadd.f32 %v349, %v365
    %v382 = vadd.f32 %v350, %v366
    %v383 = vadd.f32 %v351, %v367
    %v384 = vadd.f32 %v352, %v368
    %v385 = vadd.f32 %v353, %v369
    %v386 = vadd.f32 %v354, %v370
    %v387 = vadd.f32 %v355, %v371
    %v388 = vadd.f32 %v356, %v372
    %v389 = vadd.f32 %v357, %v373
    %v390 = vadd.f32 %v358, %v374
    %v391 = vadd.f32 %v359, %v375
    %v392 = vld [vmem:[%s63 + $0x4] sm:$0x1]
    %v393 = vld [vmem:[%s63 + $0x24] sm:$0x1]
    %v394 = vld [vmem:[%s63 + $0x44] sm:$0x1]
    %v395 = vld [vmem:[%s63 + $0x64] sm:$0x1]
    %v396 = vld [vmem:[%s63 + $0x84] sm:$0x1]
    %v397 = vld [vmem:[%s63 + $0xa4] sm:$0x1]
    %v398 = vld [vmem:[%s63 + $0xc4] sm:$0x1]
    %v399 = vld [vmem:[%s63 + $0xe4] sm:$0x1]
    %v400 = vld [vmem:[%s63 + $0x104] sm:$0x1]
    %v401 = vld [vmem:[%s63 + $0x124] sm:$0x1]
    %v402 = vld [vmem:[%s63 + $0x144] sm:$0x1]
    %v403 = vld [vmem:[%s63 + $0x164] sm:$0x1]
    %v404 = vld [vmem:[%s63 + $0x184] sm:$0x1]
    %v405 = vld [vmem:[%s63 + $0x1a4] sm:$0x1]
    %v406 = vld [vmem:[%s63 + $0x1c4] sm:$0x1]
    %v407 = vld [vmem:[%s63 + $0x1e4] sm:$0x1]
    %v408 = vadd.f32 %v376, %v392
    %v409 = vadd.f32 %v377, %v393
    %v410 = vadd.f32 %v378, %v394
    %v411 = vadd.f32 %v379, %v395
    %v412 = vadd.f32 %v380, %v396
    %v413 = vadd.f32 %v381, %v397
    %v414 = vadd.f32 %v382, %v398
    %v415 = vadd.f32 %v383, %v399
    %v416 = vadd.f32 %v384, %v400
    %v417 = vadd.f32 %v385, %v401
    %v418 = vadd.f32 %v386, %v402
    %v419 = vadd.f32 %v387, %v403
    %v420 = vadd.f32 %v388, %v404
    %v421 = vadd.f32 %v389, %v405
    %v422 = vadd.f32 %v390, %v406
    %v423 = vadd.f32 %v391, %v407
    %v424 = vld [vmem:[%s63 + $0x5] sm:$0x1]
    %v425 = vld [vmem:[%s63 + $0x25] sm:$0x1]
    %v426 = vld [vmem:[%s63 + $0x45] sm:$0x1]
    %v427 = vld [vmem:[%s63 + $0x65] sm:$0x1]
    %v428 = vld [vmem:[%s63 + $0x85] sm:$0x1]
    %v429 = vld [vmem:[%s63 + $0xa5] sm:$0x1]
    %v430 = vld [vmem:[%s63 + $0xc5] sm:$0x1]
    %v431 = vld [vmem:[%s63 + $0xe5] sm:$0x1]
    %v432 = vld [vmem:[%s63 + $0x105] sm:$0x1]
    %v433 = vld [vmem:[%s63 + $0x125] sm:$0x1]
    %v434 = vld [vmem:[%s63 + $0x145] sm:$0x1]
    %v435 = vld [vmem:[%s63 + $0x165] sm:$0x1]
    %v436 = vld [vmem:[%s63 + $0x185] sm:$0x1]
    %v437 = vld [vmem:[%s63 + $0x1a5] sm:$0x1]
    %v438 = vld [vmem:[%s63 + $0x1c5] sm:$0x1]
    %v439 = vld [vmem:[%s63 + $0x1e5] sm:$0x1]
    %v440 = vadd.f32 %v408, %v424
    %v441 = vadd.f32 %v409, %v425
    %v442 = vadd.f32 %v410, %v426
    %v443 = vadd.f32 %v411, %v427
    %v444 = vadd.f32 %v412, %v428
    %v445 = vadd.f32 %v413, %v429
    %v446 = vadd.f32 %v414, %v430
    %v447 = vadd.f32 %v415, %v431
    %v448 = vadd.f32 %v416, %v432
    %v449 = vadd.f32 %v417, %v433
    %v450 = vadd.f32 %v418, %v434
    %v451 = vadd.f32 %v419, %v435
    %v452 = vadd.f32 %v420, %v436
    %v453 = vadd.f32 %v421, %v437
    %v454 = vadd.f32 %v422, %v438
    %v455 = vadd.f32 %v423, %v439
    %v472 = vrot.slane %v441, 7
    %v473 = vsel %vm145, %v472, %v440
    %v474 = vrot.slane %v442, 6
    %v475 = vsel %vm148, %v474, %v473
    %v476 = vrot.slane %v443, 5
    %v477 = vsel %vm151, %v476, %v475
    %v478 = vrot.slane %v444, 4
    %v479 = vsel %vm154, %v478, %v477
    %v480 = vrot.slane %v445, 3
    %v481 = vsel %vm157, %v480, %v479
    %v482 = vrot.slane %v446, 2
    %v483 = vsel %vm160, %v482, %v481
    %v484 = vrot.slane %v447, 1
    %v485 = vsel %vm163, %v484, %v483
    %v486 = vrot.slane %v449, 7
    %v487 = vsel %vm145, %v486, %v448
    %v488 = vrot.slane %v450, 6
    %v489 = vsel %vm148, %v488, %v487
    %v490 = vrot.slane %v451, 5
    %v491 = vsel %vm151, %v490, %v489
    %v492 = vrot.slane %v452, 4
    %v493 = vsel %vm154, %v492, %v491
    %v494 = vrot.slane %v453, 3
    %v495 = vsel %vm157, %v494, %v493
    %v496 = vrot.slane %v454, 2
    %v497 = vsel %vm160, %v496, %v495
    %v498 = vrot.slane %v455, 1
    %v499 = vsel %vm163, %v498, %v497
    %502 = vst.msk [vmem:[#allocation2 + $0x20] sm:$0xff] %vm181, %v485
    %503 = vst.msk [vmem:[#allocation2 + $0x28] sm:$0xff] %vm181, %v499
    %v504 = vld [vmem:[%s0 + $0x6] sm:$0x1]
    %v505 = vld [vmem:[%s0 + $0x26] sm:$0x1]
    %v506 = vld [vmem:[%s0 + $0x46] sm:$0x1]
    %v507 = vld [vmem:[%s0 + $0x66] sm:$0x1]
    %v508 = vld [vmem:[%s0 + $0x86] sm:$0x1]
    %v509 = vld [vmem:[%s0 + $0xa6] sm:$0x1]
    %v510 = vld [vmem:[%s0 + $0xc6] sm:$0x1]
    %v511 = vld [vmem:[%s0 + $0xe6] sm:$0x1]
    %v512 = vld [vmem:[%s0 + $0x106] sm:$0x1]
    %v513 = vld [vmem:[%s0 + $0x126] sm:$0x1]
    %v514 = vld [vmem:[%s0 + $0x146] sm:$0x1]
    %v515 = vld [vmem:[%s0 + $0x166] sm:$0x1]
    %v516 = vld [vmem:[%s0 + $0x186] sm:$0x1]
    %v517 = vld [vmem:[%s0 + $0x1a6] sm:$0x1]
    %v518 = vld [vmem:[%s0 + $0x1c6] sm:$0x1]
    %v519 = vld [vmem:[%s0 + $0x1e6] sm:$0x1]
    %v520 = vld [vmem:[%s0 + $0x7] sm:$0x1]
    %v521 = vld [vmem:[%s0 + $0x27] sm:$0x1]
    %v522 = vld [vmem:[%s0 + $0x47] sm:$0x1]
    %v523 = vld [vmem:[%s0 + $0x67] sm:$0x1]
    %v524 = vld [vmem:[%s0 + $0x87] sm:$0x1]
    %v525 = vld [vmem:[%s0 + $0xa7] sm:$0x1]
    %v526 = vld [vmem:[%s0 + $0xc7] sm:$0x1]
    %v527 = vld [vmem:[%s0 + $0xe7] sm:$0x1]
    %v528 = vld [vmem:[%s0 + $0x107] sm:$0x1]
    %v529 = vld [vmem:[%s0 + $0x127] sm:$0x1]
    %v530 = vld [vmem:[%s0 + $0x147] sm:$0x1]
    %v531 = vld [vmem:[%s0 + $0x167] sm:$0x1]
    %v532 = vld [vmem:[%s0 + $0x187] sm:$0x1]
    %v533 = vld [vmem:[%s0 + $0x1a7] sm:$0x1]
    %v534 = vld [vmem:[%s0 + $0x1c7] sm:$0x1]
    %v535 = vld [vmem:[%s0 + $0x1e7] sm:$0x1]
    %v536 = vadd.f32 %v504, %v520
    %v537 = vadd.f32 %v505, %v521
    %v538 = vadd.f32 %v506, %v522
    %v539 = vadd.f32 %v507, %v523
    %v540 = vadd.f32 %v508, %v524
    %v541 = vadd.f32 %v509, %v525
    %v542 = vadd.f32 %v510, %v526
    %v543 = vadd.f32 %v511, %v527
    %v544 = vadd.f32 %v512, %v528
    %v545 = vadd.f32 %v513, %v529
    %v546 = vadd.f32 %v514, %v530
    %v547 = vadd.f32 %v515, %v531
    %v548 = vadd.f32 %v516, %v532
    %v549 = vadd.f32 %v517, %v533
    %v550 = vadd.f32 %v518, %v534
    %v551 = vadd.f32 %v519, %v535
    %v552 = vld [vmem:[%s63 + $0x6] sm:$0x1]
    %v553 = vld [vmem:[%s63 + $0x26] sm:$0x1]
    %v554 = vld [vmem:[%s63 + $0x46] sm:$0x1]
    %v555 = vld [vmem:[%s63 + $0x66] sm:$0x1]
    %v556 = vld [vmem:[%s63 + $0x86] sm:$0x1]
    %v557 = vld [vmem:[%s63 + $0xa6] sm:$0x1]
    %v558 = vld [vmem:[%s63 + $0xc6] sm:$0x1]
    %v559 = vld [vmem:[%s63 + $0xe6] sm:$0x1]
    %v560 = vld [vmem:[%s63 + $0x106] sm:$0x1]
    %v561 = vld [vmem:[%s63 + $0x126] sm:$0x1]
    %v562 = vld [vmem:[%s63 + $0x146] sm:$0x1]
    %v563 = vld [vmem:[%s63 + $0x166] sm:$0x1]
    %v564 = vld [vmem:[%s63 + $0x186] sm:$0x1]
    %v565 = vld [vmem:[%s63 + $0x1a6] sm:$0x1]
    %v566 = vld [vmem:[%s63 + $0x1c6] sm:$0x1]
    %v567 = vld [vmem:[%s63 + $0x1e6] sm:$0x1]
    %v568 = vadd.f32 %v536, %v552
    %v569 = vadd.f32 %v537, %v553
    %v570 = vadd.f32 %v538, %v554
    %v571 = vadd.f32 %v539, %v555
    %v572 = vadd.f32 %v540, %v556
    %v573 = vadd.f32 %v541, %v557
    %v574 = vadd.f32 %v542, %v558
    %v575 = vadd.f32 %v543, %v559
    %v576 = vadd.f32 %v544, %v560
    %v577 = vadd.f32 %v545, %v561
    %v578 = vadd.f32 %v546, %v562
    %v579 = vadd.f32 %v547, %v563
    %v580 = vadd.f32 %v548, %v564
    %v581 = vadd.f32 %v549, %v565
    %v582 = vadd.f32 %v550, %v566
    %v583 = vadd.f32 %v551, %v567
    %v584 = vld [vmem:[%s63 + $0x7] sm:$0x1]
    %v585 = vld [vmem:[%s63 + $0x27] sm:$0x1]
    %v586 = vld [vmem:[%s63 + $0x47] sm:$0x1]
    %v587 = vld [vmem:[%s63 + $0x67] sm:$0x1]
    %v588 = vld [vmem:[%s63 + $0x87] sm:$0x1]
    %v589 = vld [vmem:[%s63 + $0xa7] sm:$0x1]
    %v590 = vld [vmem:[%s63 + $0xc7] sm:$0x1]
    %v591 = vld [vmem:[%s63 + $0xe7] sm:$0x1]
    %v592 = vld [vmem:[%s63 + $0x107] sm:$0x1]
    %v593 = vld [vmem:[%s63 + $0x127] sm:$0x1]
    %v594 = vld [vmem:[%s63 + $0x147] sm:$0x1]
    %v595 = vld [vmem:[%s63 + $0x167] sm:$0x1]
    %v596 = vld [vmem:[%s63 + $0x187] sm:$0x1]
    %v597 = vld [vmem:[%s63 + $0x1a7] sm:$0x1]
    %v598 = vld [vmem:[%s63 + $0x1c7] sm:$0x1]
    %v599 = vld [vmem:[%s63 + $0x1e7] sm:$0x1]
    %v600 = vadd.f32 %v568, %v584
    %v601 = vadd.f32 %v569, %v585
    %v602 = vadd.f32 %v570, %v586
    %v603 = vadd.f32 %v571, %v587
    %v604 = vadd.f32 %v572, %v588
    %v605 = vadd.f32 %v573, %v589
    %v606 = vadd.f32 %v574, %v590
    %v607 = vadd.f32 %v575, %v591
    %v608 = vadd.f32 %v576, %v592
    %v609 = vadd.f32 %v577, %v593
    %v610 = vadd.f32 %v578, %v594
    %v611 = vadd.f32 %v579, %v595
    %v612 = vadd.f32 %v580, %v596
    %v613 = vadd.f32 %v581, %v597
    %v614 = vadd.f32 %v582, %v598
    %v615 = vadd.f32 %v583, %v599
    %v632 = vrot.slane %v601, 7
    %v633 = vsel %vm145, %v632, %v600
    %v634 = vrot.slane %v602, 6
    %v635 = vsel %vm148, %v634, %v633
    %v636 = vrot.slane %v603, 5
    %v637 = vsel %vm151, %v636, %v635
    %v638 = vrot.slane %v604, 4
    %v639 = vsel %vm154, %v638, %v637
    %v640 = vrot.slane %v605, 3
    %v641 = vsel %vm157, %v640, %v639
    %v642 = vrot.slane %v606, 2
    %v643 = vsel %vm160, %v642, %v641
    %v644 = vrot.slane %v607, 1
    %v645 = vsel %vm163, %v644, %v643
    %v646 = vrot.slane %v609, 7
    %v647 = vsel %vm145, %v646, %v608
    %v648 = vrot.slane %v610, 6
    %v649 = vsel %vm148, %v648, %v647
    %v650 = vrot.slane %v611, 5
    %v651 = vsel %vm151, %v650, %v649
    %v652 = vrot.slane %v612, 4
    %v653 = vsel %vm154, %v652, %v651
    %v654 = vrot.slane %v613, 3
    %v655 = vsel %vm157, %v654, %v653
    %v656 = vrot.slane %v614, 2
    %v657 = vsel %vm160, %v656, %v655
    %v658 = vrot.slane %v615, 1
    %v659 = vsel %vm163, %v658, %v657
    %662 = vst.msk [vmem:[#allocation2 + $0x30] sm:$0xff] %vm181, %v645
    %663 = vst.msk [vmem:[#allocation2 + $0x38] sm:$0xff] %vm181, %v659
    %v664 = vld [vmem:[%s0 + $0x8] sm:$0x1]
    %v665 = vld [vmem:[%s0 + $0x28] sm:$0x1]
    %v666 = vld [vmem:[%s0 + $0x48] sm:$0x1]
    %v667 = vld [vmem:[%s0 + $0x68] sm:$0x1]
    %v668 = vld [vmem:[%s0 + $0x88] sm:$0x1]
    %v669 = vld [vmem:[%s0 + $0xa8] sm:$0x1]
    %v670 = vld [vmem:[%s0 + $0xc8] sm:$0x1]
    %v671 = vld [vmem:[%s0 + $0xe8] sm:$0x1]
    %v672 = vld [vmem:[%s0 + $0x108] sm:$0x1]
    %v673 = vld [vmem:[%s0 + $0x128] sm:$0x1]
    %v674 = vld [vmem:[%s0 + $0x148] sm:$0x1]
    %v675 = vld [vmem:[%s0 + $0x168] sm:$0x1]
    %v676 = vld [vmem:[%s0 + $0x188] sm:$0x1]
    %v677 = vld [vmem:[%s0 + $0x1a8] sm:$0x1]
    %v678 = vld [vmem:[%s0 + $0x1c8] sm:$0x1]
    %v679 = vld [vmem:[%s0 + $0x1e8] sm:$0x1]
    %v680 = vld [vmem:[%s0 + $0x9] sm:$0x1]
    %v681 = vld [vmem:[%s0 + $0x29] sm:$0x1]
    %v682 = vld [vmem:[%s0 + $0x49] sm:$0x1]
    %v683 = vld [vmem:[%s0 + $0x69] sm:$0x1]
    %v684 = vld [vmem:[%s0 + $0x89] sm:$0x1]
    %v685 = vld [vmem:[%s0 + $0xa9] sm:$0x1]
    %v686 = vld [vmem:[%s0 + $0xc9] sm:$0x1]
    %v687 = vld [vmem:[%s0 + $0xe9] sm:$0x1]
    %v688 = vld [vmem:[%s0 + $0x109] sm:$0x1]
    %v689 = vld [vmem:[%s0 + $0x129] sm:$0x1]
    %v690 = vld [vmem:[%s0 + $0x149] sm:$0x1]
    %v691 = vld [vmem:[%s0 + $0x169] sm:$0x1]
    %v692 = vld [vmem:[%s0 + $0x189] sm:$0x1]
    %v693 = vld [vmem:[%s0 + $0x1a9] sm:$0x1]
    %v694 = vld [vmem:[%s0 + $0x1c9] sm:$0x1]
    %v695 = vld [vmem:[%s0 + $0x1e9] sm:$0x1]
    %v696 = vadd.f32 %v664, %v680
    %v697 = vadd.f32 %v665, %v681
    %v698 = vadd.f32 %v666, %v682
    %v699 = vadd.f32 %v667, %v683
    %v700 = vadd.f32 %v668, %v684
    %v701 = vadd.f32 %v669, %v685
    %v702 = vadd.f32 %v670, %v686
    %v703 = vadd.f32 %v671, %v687
    %v704 = vadd.f32 %v672, %v688
    %v705 = vadd.f32 %v673, %v689
    %v706 = vadd.f32 %v674, %v690
    %v707 = vadd.f32 %v675, %v691
    %v708 = vadd.f32 %v676, %v692
    %v709 = vadd.f32 %v677, %v693
    %v710 = vadd.f32 %v678, %v694
    %v711 = vadd.f32 %v679, %v695
    %v712 = vld [vmem:[%s63 + $0x8] sm:$0x1]
    %v713 = vld [vmem:[%s63 + $0x28] sm:$0x1]
    %v714 = vld [vmem:[%s63 + $0x48] sm:$0x1]
    %v715 = vld [vmem:[%s63 + $0x68] sm:$0x1]
    %v716 = vld [vmem:[%s63 + $0x88] sm:$0x1]
    %v717 = vld [vmem:[%s63 + $0xa8] sm:$0x1]
    %v718 = vld [vmem:[%s63 + $0xc8] sm:$0x1]
    %v719 = vld [vmem:[%s63 + $0xe8] sm:$0x1]
    %v720 = vld [vmem:[%s63 + $0x108] sm:$0x1]
    %v721 = vld [vmem:[%s63 + $0x128] sm:$0x1]
    %v722 = vld [vmem:[%s63 + $0x148] sm:$0x1]
    %v723 = vld [vmem:[%s63 + $0x168] sm:$0x1]
    %v724 = vld [vmem:[%s63 + $0x188] sm:$0x1]
    %v725 = vld [vmem:[%s63 + $0x1a8] sm:$0x1]
    %v726 = vld [vmem:[%s63 + $0x1c8] sm:$0x1]
    %v727 = vld [vmem:[%s63 + $0x1e8] sm:$0x1]
    %v728 = vadd.f32 %v696, %v712
    %v729 = vadd.f32 %v697, %v713
    %v730 = vadd.f32 %v698, %v714
    %v731 = vadd.f32 %v699, %v715
    %v732 = vadd.f32 %v700, %v716
    %v733 = vadd.f32 %v701, %v717
    %v734 = vadd.f32 %v702, %v718
    %v735 = vadd.f32 %v703, %v719
    %v736 = vadd.f32 %v704, %v720
    %v737 = vadd.f32 %v705, %v721
    %v738 = vadd.f32 %v706, %v722
    %v739 = vadd.f32 %v707, %v723
    %v740 = vadd.f32 %v708, %v724
    %v741 = vadd.f32 %v709, %v725
    %v742 = vadd.f32 %v710, %v726
    %v743 = vadd.f32 %v711, %v727
    %v744 = vld [vmem:[%s63 + $0x9] sm:$0x1]
    %v745 = vld [vmem:[%s63 + $0x29] sm:$0x1]
    %v746 = vld [vmem:[%s63 + $0x49] sm:$0x1]
    %v747 = vld [vmem:[%s63 + $0x69] sm:$0x1]
    %v748 = vld [vmem:[%s63 + $0x89] sm:$0x1]
    %v749 = vld [vmem:[%s63 + $0xa9] sm:$0x1]
    %v750 = vld [vmem:[%s63 + $0xc9] sm:$0x1]
    %v751 = vld [vmem:[%s63 + $0xe9] sm:$0x1]
    %v752 = vld [vmem:[%s63 + $0x109] sm:$0x1]
    %v753 = vld [vmem:[%s63 + $0x129] sm:$0x1]
    %v754 = vld [vmem:[%s63 + $0x149] sm:$0x1]
    %v755 = vld [vmem:[%s63 + $0x169] sm:$0x1]
    %v756 = vld [vmem:[%s63 + $0x189] sm:$0x1]
    %v757 = vld [vmem:[%s63 + $0x1a9] sm:$0x1]
    %v758 = vld [vmem:[%s63 + $0x1c9] sm:$0x1]
    %v759 = vld [vmem:[%s63 + $0x1e9] sm:$0x1]
    %v760 = vadd.f32 %v728, %v744
    %v761 = vadd.f32 %v729, %v745
    %v762 = vadd.f32 %v730, %v746
    %v763 = vadd.f32 %v731, %v747
    %v764 = vadd.f32 %v732, %v748
    %v765 = vadd.f32 %v733, %v749
    %v766 = vadd.f32 %v734, %v750
    %v767 = vadd.f32 %v735, %v751
    %v768 = vadd.f32 %v736, %v752
    %v769 = vadd.f32 %v737, %v753
    %v770 = vadd.f32 %v738, %v754
    %v771 = vadd.f32 %v739, %v755
    %v772 = vadd.f32 %v740, %v756
    %v773 = vadd.f32 %v741, %v757
    %v774 = vadd.f32 %v742, %v758
    %v775 = vadd.f32 %v743, %v759
    %v792 = vrot.slane %v761, 7
    %v793 = vsel %vm145, %v792, %v760
    %v794 = vrot.slane %v762, 6
    %v795 = vsel %vm148, %v794, %v793
    %v796 = vrot.slane %v763, 5
    %v797 = vsel %vm151, %v796, %v795
    %v798 = vrot.slane %v764, 4
    %v799 = vsel %vm154, %v798, %v797
    %v800 = vrot.slane %v765, 3
    %v801 = vsel %vm157, %v800, %v799
    %v802 = vrot.slane %v766, 2
    %v803 = vsel %vm160, %v802, %v801
    %v804 = vrot.slane %v767, 1
    %v805 = vsel %vm163, %v804, %v803
    %v806 = vrot.slane %v769, 7
    %v807 = vsel %vm145, %v806, %v768
    %v808 = vrot.slane %v770, 6
    %v809 = vsel %vm148, %v808, %v807
    %v810 = vrot.slane %v771, 5
    %v811 = vsel %vm151, %v810, %v809
    %v812 = vrot.slane %v772, 4
    %v813 = vsel %vm154, %v812, %v811
    %v814 = vrot.slane %v773, 3
    %v815 = vsel %vm157, %v814, %v813
    %v816 = vrot.slane %v774, 2
    %v817 = vsel %vm160, %v816, %v815
    %v818 = vrot.slane %v775, 1
    %v819 = vsel %vm163, %v818, %v817
    %822 = vst.msk [vmem:[#allocation2 + $0x40] sm:$0xff] %vm181, %v805
    %823 = vst.msk [vmem:[#allocation2 + $0x48] sm:$0xff] %vm181, %v819
    %v824 = vld [vmem:[%s0 + $0xa] sm:$0x1]
    %v825 = vld [vmem:[%s0 + $0x2a] sm:$0x1]
    %v826 = vld [vmem:[%s0 + $0x4a] sm:$0x1]
    %v827 = vld [vmem:[%s0 + $0x6a] sm:$0x1]
    %v828 = vld [vmem:[%s0 + $0x8a] sm:$0x1]
    %v829 = vld [vmem:[%s0 + $0xaa] sm:$0x1]
    %v830 = vld [vmem:[%s0 + $0xca] sm:$0x1]
    %v831 = vld [vmem:[%s0 + $0xea] sm:$0x1]
    %v832 = vld [vmem:[%s0 + $0x10a] sm:$0x1]
    %v833 = vld [vmem:[%s0 + $0x12a] sm:$0x1]
    %v834 = vld [vmem:[%s0 + $0x14a] sm:$0x1]
    %v835 = vld [vmem:[%s0 + $0x16a] sm:$0x1]
    %v836 = vld [vmem:[%s0 + $0x18a] sm:$0x1]
    %v837 = vld [vmem:[%s0 + $0x1aa] sm:$0x1]
    %v838 = vld [vmem:[%s0 + $0x1ca] sm:$0x1]
    %v839 = vld [vmem:[%s0 + $0x1ea] sm:$0x1]
    %v840 = vld [vmem:[%s0 + $0xb] sm:$0x1]
    %v841 = vld [vmem:[%s0 + $0x2b] sm:$0x1]
    %v842 = vld [vmem:[%s0 + $0x4b] sm:$0x1]
    %v843 = vld [vmem:[%s0 + $0x6b] sm:$0x1]
    %v844 = vld [vmem:[%s0 + $0x8b] sm:$0x1]
    %v845 = vld [vmem:[%s0 + $0xab] sm:$0x1]
    %v846 = vld [vmem:[%s0 + $0xcb] sm:$0x1]
    %v847 = vld [vmem:[%s0 + $0xeb] sm:$0x1]
    %v848 = vld [vmem:[%s0 + $0x10b] sm:$0x1]
    %v849 = vld [vmem:[%s0 + $0x12b] sm:$0x1]
    %v850 = vld [vmem:[%s0 + $0x14b] sm:$0x1]
    %v851 = vld [vmem:[%s0 + $0x16b] sm:$0x1]
    %v852 = vld [vmem:[%s0 + $0x18b] sm:$0x1]
    %v853 = vld [vmem:[%s0 + $0x1ab] sm:$0x1]
    %v854 = vld [vmem:[%s0 + $0x1cb] sm:$0x1]
    %v855 = vld [vmem:[%s0 + $0x1eb] sm:$0x1]
    %v856 = vadd.f32 %v824, %v840
    %v857 = vadd.f32 %v825, %v841
    %v858 = vadd.f32 %v826, %v842
    %v859 = vadd.f32 %v827, %v843
    %v860 = vadd.f32 %v828, %v844
    %v861 = vadd.f32 %v829, %v845
    %v862 = vadd.f32 %v830, %v846
    %v863 = vadd.f32 %v831, %v847
    %v864 = vadd.f32 %v832, %v848
    %v865 = vadd.f32 %v833, %v849
    %v866 = vadd.f32 %v834, %v850
    %v867 = vadd.f32 %v835, %v851
    %v868 = vadd.f32 %v836, %v852
    %v869 = vadd.f32 %v837, %v853
    %v870 = vadd.f32 %v838, %v854
    %v871 = vadd.f32 %v839, %v855
    %v872 = vld [vmem:[%s63 + $0xa] sm:$0x1]
    %v873 = vld [vmem:[%s63 + $0x2a] sm:$0x1]
    %v874 = vld [vmem:[%s63 + $0x4a] sm:$0x1]
    %v875 = vld [vmem:[%s63 + $0x6a] sm:$0x1]
    %v876 = vld [vmem:[%s63 + $0x8a] sm:$0x1]
    %v877 = vld [vmem:[%s63 + $0xaa] sm:$0x1]
    %v878 = vld [vmem:[%s63 + $0xca] sm:$0x1]
    %v879 = vld [vmem:[%s63 + $0xea] sm:$0x1]
    %v880 = vld [vmem:[%s63 + $0x10a] sm:$0x1]
    %v881 = vld [vmem:[%s63 + $0x12a] sm:$0x1]
    %v882 = vld [vmem:[%s63 + $0x14a] sm:$0x1]
    %v883 = vld [vmem:[%s63 + $0x16a] sm:$0x1]
    %v884 = vld [vmem:[%s63 + $0x18a] sm:$0x1]
    %v885 = vld [vmem:[%s63 + $0x1aa] sm:$0x1]
    %v886 = vld [vmem:[%s63 + $0x1ca] sm:$0x1]
    %v887 = vld [vmem:[%s63 + $0x1ea] sm:$0x1]
    %v888 = vadd.f32 %v856, %v872
    %v889 = vadd.f32 %v857, %v873
    %v890 = vadd.f32 %v858, %v874
    %v891 = vadd.f32 %v859, %v875
    %v892 = vadd.f32 %v860, %v876
    %v893 = vadd.f32 %v861, %v877
    %v894 = vadd.f32 %v862, %v878
    %v895 = vadd.f32 %v863, %v879
    %v896 = vadd.f32 %v864, %v880
    %v897 = vadd.f32 %v865, %v881
    %v898 = vadd.f32 %v866, %v882
    %v899 = vadd.f32 %v867, %v883
    %v900 = vadd.f32 %v868, %v884
    %v901 = vadd.f32 %v869, %v885
    %v902 = vadd.f32 %v870, %v886
    %v903 = vadd.f32 %v871, %v887
    %v904 = vld [vmem:[%s63 + $0xb] sm:$0x1]
    %v905 = vld [vmem:[%s63 + $0x2b] sm:$0x1]
    %v906 = vld [vmem:[%s63 + $0x4b] sm:$0x1]
    %v907 = vld [vmem:[%s63 + $0x6b] sm:$0x1]
    %v908 = vld [vmem:[%s63 + $0x8b] sm:$0x1]
    %v909 = vld [vmem:[%s63 + $0xab] sm:$0x1]
    %v910 = vld [vmem:[%s63 + $0xcb] sm:$0x1]
    %v911 = vld [vmem:[%s63 + $0xeb] sm:$0x1]
    %v912 = vld [vmem:[%s63 + $0x10b] sm:$0x1]
    %v913 = vld [vmem:[%s63 + $0x12b] sm:$0x1]
    %v914 = vld [vmem:[%s63 + $0x14b] sm:$0x1]
    %v915 = vld [vmem:[%s63 + $0x16b] sm:$0x1]
    %v916 = vld [vmem:[%s63 + $0x18b] sm:$0x1]
    %v917 = vld [vmem:[%s63 + $0x1ab] sm:$0x1]
    %v918 = vld [vmem:[%s63 + $0x1cb] sm:$0x1]
    %v919 = vld [vmem:[%s63 + $0x1eb] sm:$0x1]
    %v920 = vadd.f32 %v888, %v904
    %v921 = vadd.f32 %v889, %v905
    %v922 = vadd.f32 %v890, %v906
    %v923 = vadd.f32 %v891, %v907
    %v924 = vadd.f32 %v892, %v908
    %v925 = vadd.f32 %v893, %v909
    %v926 = vadd.f32 %v894, %v910
    %v927 = vadd.f32 %v895, %v911
    %v928 = vadd.f32 %v896, %v912
    %v929 = vadd.f32 %v897, %v913
    %v930 = vadd.f32 %v898, %v914
    %v931 = vadd.f32 %v899, %v915
    %v932 = vadd.f32 %v900, %v916
    %v933 = vadd.f32 %v901, %v917
    %v934 = vadd.f32 %v902, %v918
    %v935 = vadd.f32 %v903, %v919
    %v952 = vrot.slane %v921, 7
    %v953 = vsel %vm145, %v952, %v920
    %v954 = vrot.slane %v922, 6
    %v955 = vsel %vm148, %v954, %v953
    %v956 = vrot.slane %v923, 5
    %v957 = vsel %vm151, %v956, %v955
    %v958 = vrot.slane %v924, 4
    %v959 = vsel %vm154, %v958, %v957
    %v960 = vrot.slane %v925, 3
    %v961 = vsel %vm157, %v960, %v959
    %v962 = vrot.slane %v926, 2
    %v963 = vsel %vm160, %v962, %v961
    %v964 = vrot.slane %v927, 1
    %v965 = vsel %vm163, %v964, %v963
    %v966 = vrot.slane %v929, 7
    %v967 = vsel %vm145, %v966, %v928
    %v968 = vrot.slane %v930, 6
    %v969 = vsel %vm148, %v968, %v967
    %v970 = vrot.slane %v931, 5
    %v971 = vsel %vm151, %v970, %v969
    %v972 = vrot.slane %v932, 4
    %v973 = vsel %vm154, %v972, %v971
    %v974 = vrot.slane %v933, 3
    %v975 = vsel %vm157, %v974, %v973
    %v976 = vrot.slane %v934, 2
    %v977 = vsel %vm160, %v976, %v975
    %v978 = vrot.slane %v935, 1
    %v979 = vsel %vm163, %v978, %v977
    %982 = vst.msk [vmem:[#allocation2 + $0x50] sm:$0xff] %vm181, %v965
    %983 = vst.msk [vmem:[#allocation2 + $0x58] sm:$0xff] %vm181, %v979
    %v984 = vld [vmem:[%s0 + $0xc] sm:$0x1]
    %v985 = vld [vmem:[%s0 + $0x2c] sm:$0x1]
    %v986 = vld [vmem:[%s0 + $0x4c] sm:$0x1]
    %v987 = vld [vmem:[%s0 + $0x6c] sm:$0x1]
    %v988 = vld [vmem:[%s0 + $0x8c] sm:$0x1]
    %v989 = vld [vmem:[%s0 + $0xac] sm:$0x1]
    %v990 = vld [vmem:[%s0 + $0xcc] sm:$0x1]
    %v991 = vld [vmem:[%s0 + $0xec] sm:$0x1]
    %v992 = vld [vmem:[%s0 + $0x10c] sm:$0x1]
    %v993 = vld [vmem:[%s0 + $0x12c] sm:$0x1]
    %v994 = vld [vmem:[%s0 + $0x14c] sm:$0x1]
    %v995 = vld [vmem:[%s0 + $0x16c] sm:$0x1]
    %v996 = vld [vmem:[%s0 + $0x18c] sm:$0x1]
    %v997 = vld [vmem:[%s0 + $0x1ac] sm:$0x1]
    %v998 = vld [vmem:[%s0 + $0x1cc] sm:$0x1]
    %v999 = vld [vmem:[%s0 + $0x1ec] sm:$0x1]
    %v1000 = vld [vmem:[%s0 + $0xd] sm:$0x1]
    %v1001 = vld [vmem:[%s0 + $0x2d] sm:$0x1]
    %v1002 = vld [vmem:[%s0 + $0x4d] sm:$0x1]
    %v1003 = vld [vmem:[%s0 + $0x6d] sm:$0x1]
    %v1004 = vld [vmem:[%s0 + $0x8d] sm:$0x1]
    %v1005 = vld [vmem:[%s0 + $0xad] sm:$0x1]
    %v1006 = vld [vmem:[%s0 + $0xcd] sm:$0x1]
    %v1007 = vld [vmem:[%s0 + $0xed] sm:$0x1]
    %v1008 = vld [vmem:[%s0 + $0x10d] sm:$0x1]
    %v1009 = vld [vmem:[%s0 + $0x12d] sm:$0x1]
    %v1010 = vld [vmem:[%s0 + $0x14d] sm:$0x1]
    %v1011 = vld [vmem:[%s0 + $0x16d] sm:$0x1]
    %v1012 = vld [vmem:[%s0 + $0x18d] sm:$0x1]
    %v1013 = vld [vmem:[%s0 + $0x1ad] sm:$0x1]
    %v1014 = vld [vmem:[%s0 + $0x1cd] sm:$0x1]
    %v1015 = vld [vmem:[%s0 + $0x1ed] sm:$0x1]
    %v1016 = vadd.f32 %v984, %v1000
    %v1017 = vadd.f32 %v985, %v1001
    %v1018 = vadd.f32 %v986, %v1002
    %v1019 = vadd.f32 %v987, %v1003
    %v1020 = vadd.f32 %v988, %v1004
    %v1021 = vadd.f32 %v989, %v1005
    %v1022 = vadd.f32 %v990, %v1006
    %v1023 = vadd.f32 %v991, %v1007
    %v1024 = vadd.f32 %v992, %v1008
    %v1025 = vadd.f32 %v993, %v1009
    %v1026 = vadd.f32 %v994, %v1010
    %v1027 = vadd.f32 %v995, %v1011
    %v1028 = vadd.f32 %v996, %v1012
    %v1029 = vadd.f32 %v997, %v1013
    %v1030 = vadd.f32 %v998, %v1014
    %v1031 = vadd.f32 %v999, %v1015
    %v1032 = vld [vmem:[%s63 + $0xc] sm:$0x1]
    %v1033 = vld [vmem:[%s63 + $0x2c] sm:$0x1]
    %v1034 = vld [vmem:[%s63 + $0x4c] sm:$0x1]
    %v1035 = vld [vmem:[%s63 + $0x6c] sm:$0x1]
    %v1036 = vld [vmem:[%s63 + $0x8c] sm:$0x1]
    %v1037 = vld [vmem:[%s63 + $0xac] sm:$0x1]
    %v1038 = vld [vmem:[%s63 + $0xcc] sm:$0x1]
    %v1039 = vld [vmem:[%s63 + $0xec] sm:$0x1]
    %v1040 = vld [vmem:[%s63 + $0x10c] sm:$0x1]
    %v1041 = vld [vmem:[%s63 + $0x12c] sm:$0x1]
    %v1042 = vld [vmem:[%s63 + $0x14c] sm:$0x1]
    %v1043 = vld [vmem:[%s63 + $0x16c] sm:$0x1]
    %v1044 = vld [vmem:[%s63 + $0x18c] sm:$0x1]
    %v1045 = vld [vmem:[%s63 + $0x1ac] sm:$0x1]
    %v1046 = vld [vmem:[%s63 + $0x1cc] sm:$0x1]
    %v1047 = vld [vmem:[%s63 + $0x1ec] sm:$0x1]
    %v1048 = vadd.f32 %v1016, %v1032
    %v1049 = vadd.f32 %v1017, %v1033
    %v1050 = vadd.f32 %v1018, %v1034
    %v1051 = vadd.f32 %v1019, %v1035
    %v1052 = vadd.f32 %v1020, %v1036
    %v1053 = vadd.f32 %v1021, %v1037
    %v1054 = vadd.f32 %v1022, %v1038
    %v1055 = vadd.f32 %v1023, %v1039
    %v1056 = vadd.f32 %v1024, %v1040
    %v1057 = vadd.f32 %v1025, %v1041
    %v1058 = vadd.f32 %v1026, %v1042
    %v1059 = vadd.f32 %v1027, %v1043
    %v1060 = vadd.f32 %v1028, %v1044
    %v1061 = vadd.f32 %v1029, %v1045
    %v1062 = vadd.f32 %v1030, %v1046
    %v1063 = vadd.f32 %v1031, %v1047
    %v1064 = vld [vmem:[%s63 + $0xd] sm:$0x1]
    %v1065 = vld [vmem:[%s63 + $0x2d] sm:$0x1]
    %v1066 = vld [vmem:[%s63 + $0x4d] sm:$0x1]
    %v1067 = vld [vmem:[%s63 + $0x6d] sm:$0x1]
    %v1068 = vld [vmem:[%s63 + $0x8d] sm:$0x1]
    %v1069 = vld [vmem:[%s63 + $0xad] sm:$0x1]
    %v1070 = vld [vmem:[%s63 + $0xcd] sm:$0x1]
    %v1071 = vld [vmem:[%s63 + $0xed] sm:$0x1]
    %v1072 = vld [vmem:[%s63 + $0x10d] sm:$0x1]
    %v1073 = vld [vmem:[%s63 + $0x12d] sm:$0x1]
    %v1074 = vld [vmem:[%s63 + $0x14d] sm:$0x1]
    %v1075 = vld [vmem:[%s63 + $0x16d] sm:$0x1]
    %v1076 = vld [vmem:[%s63 + $0x18d] sm:$0x1]
    %v1077 = vld [vmem:[%s63 + $0x1ad] sm:$0x1]
    %v1078 = vld [vmem:[%s63 + $0x1cd] sm:$0x1]
    %v1079 = vld [vmem:[%s63 + $0x1ed] sm:$0x1]
    %v1080 = vadd.f32 %v1048, %v1064
    %v1081 = vadd.f32 %v1049, %v1065
    %v1082 = vadd.f32 %v1050, %v1066
    %v1083 = vadd.f32 %v1051, %v1067
    %v1084 = vadd.f32 %v1052, %v1068
    %v1085 = vadd.f32 %v1053, %v1069
    %v1086 = vadd.f32 %v1054, %v1070
    %v1087 = vadd.f32 %v1055, %v1071
    %v1088 = vadd.f32 %v1056, %v1072
    %v1089 = vadd.f32 %v1057, %v1073
    %v1090 = vadd.f32 %v1058, %v1074
    %v1091 = vadd.f32 %v1059, %v1075
    %v1092 = vadd.f32 %v1060, %v1076
    %v1093 = vadd.f32 %v1061, %v1077
    %v1094 = vadd.f32 %v1062, %v1078
    %v1095 = vadd.f32 %v1063, %v1079
    %v1112 = vrot.slane %v1081, 7
    %v1113 = vsel %vm145, %v1112, %v1080
    %v1114 = vrot.slane %v1082, 6
    %v1115 = vsel %vm148, %v1114, %v1113
    %v1116 = vrot.slane %v1083, 5
    %v1117 = vsel %vm151, %v1116, %v1115
    %v1118 = vrot.slane %v1084, 4
    %v1119 = vsel %vm154, %v1118, %v1117
    %v1120 = vrot.slane %v1085, 3
    %v1121 = vsel %vm157, %v1120, %v1119
    %v1122 = vrot.slane %v1086, 2
    %v1123 = vsel %vm160, %v1122, %v1121
    %v1124 = vrot.slane %v1087, 1
    %v1125 = vsel %vm163, %v1124, %v1123
    %v1126 = vrot.slane %v1089, 7
    %v1127 = vsel %vm145, %v1126, %v1088
    %v1128 = vrot.slane %v1090, 6
    %v1129 = vsel %vm148, %v1128, %v1127
    %v1130 = vrot.slane %v1091, 5
    %v1131 = vsel %vm151, %v1130, %v1129
    %v1132 = vrot.slane %v1092, 4
    %v1133 = vsel %vm154, %v1132, %v1131
    %v1134 = vrot.slane %v1093, 3
    %v1135 = vsel %vm157, %v1134, %v1133
    %v1136 = vrot.slane %v1094, 2
    %v1137 = vsel %vm160, %v1136, %v1135
    %v1138 = vrot.slane %v1095, 1
    %v1139 = vsel %vm163, %v1138, %v1137
    %1142 = vst.msk [vmem:[#allocation2 + $0x60] sm:$0xff] %vm181, %v1125
    %1143 = vst.msk [vmem:[#allocation2 + $0x68] sm:$0xff] %vm181, %v1139
    %v1144 = vld [vmem:[%s0 + $0xe] sm:$0x1]
    %v1145 = vld [vmem:[%s0 + $0x2e] sm:$0x1]
    %v1146 = vld [vmem:[%s0 + $0x4e] sm:$0x1]
    %v1147 = vld [vmem:[%s0 + $0x6e] sm:$0x1]
    %v1148 = vld [vmem:[%s0 + $0x8e] sm:$0x1]
    %v1149 = vld [vmem:[%s0 + $0xae] sm:$0x1]
    %v1150 = vld [vmem:[%s0 + $0xce] sm:$0x1]
    %v1151 = vld [vmem:[%s0 + $0xee] sm:$0x1]
    %v1152 = vld [vmem:[%s0 + $0x10e] sm:$0x1]
    %v1153 = vld [vmem:[%s0 + $0x12e] sm:$0x1]
    %v1154 = vld [vmem:[%s0 + $0x14e] sm:$0x1]
    %v1155 = vld [vmem:[%s0 + $0x16e] sm:$0x1]
    %v1156 = vld [vmem:[%s0 + $0x18e] sm:$0x1]
    %v1157 = vld [vmem:[%s0 + $0x1ae] sm:$0x1]
    %v1158 = vld [vmem:[%s0 + $0x1ce] sm:$0x1]
    %v1159 = vld [vmem:[%s0 + $0x1ee] sm:$0x1]
    %v1160 = vld [vmem:[%s0 + $0xf] sm:$0x1]
    %v1161 = vld [vmem:[%s0 + $0x2f] sm:$0x1]
    %v1162 = vld [vmem:[%s0 + $0x4f] sm:$0x1]
    %v1163 = vld [vmem:[%s0 + $0x6f] sm:$0x1]
    %v1164 = vld [vmem:[%s0 + $0x8f] sm:$0x1]
    %v1165 = vld [vmem:[%s0 + $0xaf] sm:$0x1]
    %v1166 = vld [vmem:[%s0 + $0xcf] sm:$0x1]
    %v1167 = vld [vmem:[%s0 + $0xef] sm:$0x1]
    %v1168 = vld [vmem:[%s0 + $0x10f] sm:$0x1]
    %v1169 = vld [vmem:[%s0 + $0x12f] sm:$0x1]
    %v1170 = vld [vmem:[%s0 + $0x14f] sm:$0x1]
    %v1171 = vld [vmem:[%s0 + $0x16f] sm:$0x1]
    %v1172 = vld [vmem:[%s0 + $0x18f] sm:$0x1]
    %v1173 = vld [vmem:[%s0 + $0x1af] sm:$0x1]
    %v1174 = vld [vmem:[%s0 + $0x1cf] sm:$0x1]
    %v1175 = vld [vmem:[%s0 + $0x1ef] sm:$0x1]
    %v1176 = vadd.f32 %v1144, %v1160
    %v1177 = vadd.f32 %v1145, %v1161
    %v1178 = vadd.f32 %v1146, %v1162
    %v1179 = vadd.f32 %v1147, %v1163
    %v1180 = vadd.f32 %v1148, %v1164
    %v1181 = vadd.f32 %v1149, %v1165
    %v1182 = vadd.f32 %v1150, %v1166
    %v1183 = vadd.f32 %v1151, %v1167
    %v1184 = vadd.f32 %v1152, %v1168
    %v1185 = vadd.f32 %v1153, %v1169
    %v1186 = vadd.f32 %v1154, %v1170
    %v1187 = vadd.f32 %v1155, %v1171
    %v1188 = vadd.f32 %v1156, %v1172
    %v1189 = vadd.f32 %v1157, %v1173
    %v1190 = vadd.f32 %v1158, %v1174
    %v1191 = vadd.f32 %v1159, %v1175
    %v1192 = vld [vmem:[%s63 + $0xe] sm:$0x1]
    %v1193 = vld [vmem:[%s63 + $0x2e] sm:$0x1]
    %v1194 = vld [vmem:[%s63 + $0x4e] sm:$0x1]
    %v1195 = vld [vmem:[%s63 + $0x6e] sm:$0x1]
    %v1196 = vld [vmem:[%s63 + $0x8e] sm:$0x1]
    %v1197 = vld [vmem:[%s63 + $0xae] sm:$0x1]
    %v1198 = vld [vmem:[%s63 + $0xce] sm:$0x1]
    %v1199 = vld [vmem:[%s63 + $0xee] sm:$0x1]
    %v1200 = vld [vmem:[%s63 + $0x10e] sm:$0x1]
    %v1201 = vld [vmem:[%s63 + $0x12e] sm:$0x1]
    %v1202 = vld [vmem:[%s63 + $0x14e] sm:$0x1]
    %v1203 = vld [vmem:[%s63 + $0x16e] sm:$0x1]
    %v1204 = vld [vmem:[%s63 + $0x18e] sm:$0x1]
    %v1205 = vld [vmem:[%s63 + $0x1ae] sm:$0x1]
    %v1206 = vld [vmem:[%s63 + $0x1ce] sm:$0x1]
    %v1207 = vld [vmem:[%s63 + $0x1ee] sm:$0x1]
    %v1208 = vadd.f32 %v1176, %v1192
    %v1209 = vadd.f32 %v1177, %v1193
    %v1210 = vadd.f32 %v1178, %v1194
    %v1211 = vadd.f32 %v1179, %v1195
    %v1212 = vadd.f32 %v1180, %v1196
    %v1213 = vadd.f32 %v1181, %v1197
    %v1214 = vadd.f32 %v1182, %v1198
    %v1215 = vadd.f32 %v1183, %v1199
    %v1216 = vadd.f32 %v1184, %v1200
    %v1217 = vadd.f32 %v1185, %v1201
    %v1218 = vadd.f32 %v1186, %v1202
    %v1219 = vadd.f32 %v1187, %v1203
    %v1220 = vadd.f32 %v1188, %v1204
    %v1221 = vadd.f32 %v1189, %v1205
    %v1222 = vadd.f32 %v1190, %v1206
    %v1223 = vadd.f32 %v1191, %v1207
    %v1224 = vld [vmem:[%s63 + $0xf] sm:$0x1]
    %v1225 = vld [vmem:[%s63 + $0x2f] sm:$0x1]
    %v1226 = vld [vmem:[%s63 + $0x4f] sm:$0x1]
    %v1227 = vld [vmem:[%s63 + $0x6f] sm:$0x1]
    %v1228 = vld [vmem:[%s63 + $0x8f] sm:$0x1]
    %v1229 = vld [vmem:[%s63 + $0xaf] sm:$0x1]
    %v1230 = vld [vmem:[%s63 + $0xcf] sm:$0x1]
    %v1231 = vld [vmem:[%s63 + $0xef] sm:$0x1]
    %v1232 = vld [vmem:[%s63 + $0x10f] sm:$0x1]
    %v1233 = vld [vmem:[%s63 + $0x12f] sm:$0x1]
    %v1234 = vld [vmem:[%s63 + $0x14f] sm:$0x1]
    %v1235 = vld [vmem:[%s63 + $0x16f] sm:$0x1]
    %v1236 = vld [vmem:[%s63 + $0x18f] sm:$0x1]
    %v1237 = vld [vmem:[%s63 + $0x1af] sm:$0x1]
    %v1238 = vld [vmem:[%s63 + $0x1cf] sm:$0x1]
    %v1239 = vld [vmem:[%s63 + $0x1ef] sm:$0x1]
    %v1240 = vadd.f32 %v1208, %v1224
    %v1241 = vadd.f32 %v1209, %v1225
    %v1242 = vadd.f32 %v1210, %v1226
    %v1243 = vadd.f32 %v1211, %v1227
    %v1244 = vadd.f32 %v1212, %v1228
    %v1245 = vadd.f32 %v1213, %v1229
    %v1246 = vadd.f32 %v1214, %v1230
    %v1247 = vadd.f32 %v1215, %v1231
    %v1248 = vadd.f32 %v1216, %v1232
    %v1249 = vadd.f32 %v1217, %v1233
    %v1250 = vadd.f32 %v1218, %v1234
    %v1251 = vadd.f32 %v1219, %v1235
    %v1252 = vadd.f32 %v1220, %v1236
    %v1253 = vadd.f32 %v1221, %v1237
    %v1254 = vadd.f32 %v1222, %v1238
    %v1255 = vadd.f32 %v1223, %v1239
    %v1272 = vrot.slane %v1241, 7
    %v1273 = vsel %vm145, %v1272, %v1240
    %v1274 = vrot.slane %v1242, 6
    %v1275 = vsel %vm148, %v1274, %v1273
    %v1276 = vrot.slane %v1243, 5
    %v1277 = vsel %vm151, %v1276, %v1275
    %v1278 = vrot.slane %v1244, 4
    %v1279 = vsel %vm154, %v1278, %v1277
    %v1280 = vrot.slane %v1245, 3
    %v1281 = vsel %vm157, %v1280, %v1279
    %v1282 = vrot.slane %v1246, 2
    %v1283 = vsel %vm160, %v1282, %v1281
    %v1284 = vrot.slane %v1247, 1
    %v1285 = vsel %vm163, %v1284, %v1283
    %v1286 = vrot.slane %v1249, 7
    %v1287 = vsel %vm145, %v1286, %v1248
    %v1288 = vrot.slane %v1250, 6
    %v1289 = vsel %vm148, %v1288, %v1287
    %v1290 = vrot.slane %v1251, 5
    %v1291 = vsel %vm151, %v1290, %v1289
    %v1292 = vrot.slane %v1252, 4
    %v1293 = vsel %vm154, %v1292, %v1291
    %v1294 = vrot.slane %v1253, 3
    %v1295 = vsel %vm157, %v1294, %v1293
    %v1296 = vrot.slane %v1254, 2
    %v1297 = vsel %vm160, %v1296, %v1295
    %v1298 = vrot.slane %v1255, 1
    %v1299 = vsel %vm163, %v1298, %v1297
    %1302 = vst.msk [vmem:[#allocation2 + $0x70] sm:$0xff] %vm181, %v1285
    %1303 = vst.msk [vmem:[#allocation2 + $0x78] sm:$0xff] %vm181, %v1299
    %v1304 = vld [vmem:[#allocation2] sm:$0xff]
    %v1305 = vld [vmem:[#allocation2 + $0x8] sm:$0xff]
    %v1306 = vld [vmem:[#allocation2 + $0x10] sm:$0xff]
    %v1307 = vld [vmem:[#allocation2 + $0x18] sm:$0xff]
    %v1308 = vld [vmem:[#allocation2 + $0x20] sm:$0xff]
    %v1309 = vld [vmem:[#allocation2 + $0x28] sm:$0xff]
    %v1310 = vld [vmem:[#allocation2 + $0x30] sm:$0xff]
    %v1311 = vld [vmem:[#allocation2 + $0x38] sm:$0xff]
    %v1312 = vld [vmem:[#allocation2 + $0x40] sm:$0xff]
    %v1313 = vld [vmem:[#allocation2 + $0x48] sm:$0xff]
    %v1314 = vld [vmem:[#allocation2 + $0x50] sm:$0xff]
    %v1315 = vld [vmem:[#allocation2 + $0x58] sm:$0xff]
    %v1316 = vld [vmem:[#allocation2 + $0x60] sm:$0xff]
    %v1317 = vld [vmem:[#allocation2 + $0x68] sm:$0xff]
    %v1318 = vld [vmem:[#allocation2 + $0x70] sm:$0xff]
    %v1319 = vld [vmem:[#allocation2 + $0x78] sm:$0xff]
    %v1320 = vld [vmem:[%s1] sm:$0xf]
    %v1321 = vld [vmem:[%s2] sm:$0x1]
    %v1323 = vperm.slane %v1321, 0
    %v1326 = vsel %vm181, %v1304, 0
    %v1329 = vsel %vm181, %v1305, 0
    %v1332 = vsel %vm181, %v1306, 0
    %v1335 = vsel %vm181, %v1307, 0
    %v1338 = vsel %vm181, %v1308, 0
    %v1341 = vsel %vm181, %v1309, 0
    %v1344 = vsel %vm181, %v1310, 0
    %v1347 = vsel %vm181, %v1311, 0
    %v1350 = vsel %vm181, %v1312, 0
    %v1353 = vsel %vm181, %v1313, 0
    %v1356 = vsel %vm181, %v1314, 0
    %v1359 = vsel %vm181, %v1315, 0
    %v1362 = vsel %vm181, %v1316, 0
    %v1365 = vsel %vm181, %v1317, 0
    %v1368 = vsel %vm181, %v1318, 0
    %v1371 = vsel %vm181, %v1319, 0
    %vm1373 = vcmask 1043456
    %v1375 = vsel %vm1373, %v1320, 0
    %1377 = vmatpush.msra.mxu0 0.0
    %1378 = vmatpush.msra.mxu0 0.0
    %1379 = vmatpush.msra.mxu0 0.0
    %1380 = vmatpush.msra.mxu0 0.0
    %1381 = vmatpush.msra.mxu0 0.0
    %1382 = vmatpush.msra.mxu0 0.0
    %1383 = vmatpush.msra.mxu0 0.0
    %1384 = vmatpush.msra.mxu0 0.0
    %1385 = vmatpush.msra.mxu0 0.0
    %1386 = vmatpush.msra.mxu0 0.0
    %1387 = vmatpush.msra.mxu0 0.0
    %1388 = vmatpush.msra.mxu0 0.0
    %1389 = vmatpush.msra.mxu0 0.0
    %1390 = vmatpush.msra.mxu0 0.0
    %1391 = vmatpush.msra.mxu0 0.0
    %1392 = vmatpush.msra.mxu0 %v1375
    %1393 = vmatmul.f32.gmra.mxu0 %v1326
    %v1394 = vpop.f32.mrf.mxu0
    %v1395 = vadd.f32 %v1323, %v1394
    %1396 = vmatmul.f32.gmra.mxu0 %v1329
    %v1397 = vpop.f32.mrf.mxu0
    %v1398 = vadd.f32 %v1323, %v1397
    %1399 = vmatmul.f32.gmra.mxu0 %v1332
    %v1400 = vpop.f32.mrf.mxu0
    %v1401 = vadd.f32 %v1323, %v1400
    %1402 = vmatmul.f32.gmra.mxu0 %v1335
    %v1403 = vpop.f32.mrf.mxu0
    %v1404 = vadd.f32 %v1323, %v1403
    %1405 = vmatmul.f32.gmra.mxu0 %v1338
    %v1406 = vpop.f32.mrf.mxu0
    %v1407 = vadd.f32 %v1323, %v1406
    %1408 = vmatmul.f32.gmra.mxu0 %v1341
    %v1409 = vpop.f32.mrf.mxu0
    %v1410 = vadd.f32 %v1323, %v1409
    %1411 = vmatmul.f32.gmra.mxu0 %v1344
    %v1412 = vpop.f32.mrf.mxu0
    %v1413 = vadd.f32 %v1323, %v1412
    %1414 = vmatmul.f32.gmra.mxu0 %v1347
    %v1415 = vpop.f32.mrf.mxu0
    %v1416 = vadd.f32 %v1323, %v1415
    %1417 = vmatmul.f32.gmra.mxu0 %v1350
    %v1418 = vpop.f32.mrf.mxu0
    %v1419 = vadd.f32 %v1323, %v1418
    %1420 = vmatmul.f32.gmra.mxu0 %v1353
    %v1421 = vpop.f32.mrf.mxu0
    %v1422 = vadd.f32 %v1323, %v1421
    %1423 = vmatmul.f32.gmra.mxu0 %v1356
    %v1424 = vpop.f32.mrf.mxu0
    %v1425 = vadd.f32 %v1323, %v1424
    %1426 = vmatmul.f32.gmra.mxu0 %v1359
    %v1427 = vpop.f32.mrf.mxu0
    %v1428 = vadd.f32 %v1323, %v1427
    %1429 = vmatmul.f32.gmra.mxu0 %v1362
    %v1430 = vpop.f32.mrf.mxu0
    %v1431 = vadd.f32 %v1323, %v1430
    %1432 = vmatmul.f32.gmra.mxu0 %v1365
    %v1433 = vpop.f32.mrf.mxu0
    %v1434 = vadd.f32 %v1323, %v1433
    %1435 = vmatmul.f32.gmra.mxu0 %v1368
    %v1436 = vpop.f32.mrf.mxu0
    %v1437 = vadd.f32 %v1323, %v1436
    %1438 = vmatmul.f32.gmra.mxu0 %v1371
    %v1439 = vpop.f32.mrf.mxu0
    %v1440 = vadd.f32 %v1323, %v1439
    %1441 = vdwg.mxu0
    %v1444 = vrot.slane %v1395, 1
    %v1445 = vrot.slane %v1395, 2
    %v1446 = vrot.slane %v1395, 3
    %v1447 = vrot.slane %v1395, 4
    %v1448 = vrot.slane %v1395, 5
    %v1449 = vrot.slane %v1395, 6
    %v1450 = vrot.slane %v1395, 7
    %v1451 = vrot.slane %v1398, 1
    %v1452 = vrot.slane %v1398, 2
    %v1453 = vrot.slane %v1398, 3
    %v1454 = vrot.slane %v1398, 4
    %v1455 = vrot.slane %v1398, 5
    %v1456 = vrot.slane %v1398, 6
    %v1457 = vrot.slane %v1398, 7
    %1472 = vst [vmem:[#allocation3] sm:$0x1] %v1395
    %1473 = vst [vmem:[#allocation3 + $0x8] sm:$0x1] %v1444
    %1474 = vst [vmem:[#allocation3 + $0x10] sm:$0x1] %v1445
    %1475 = vst [vmem:[#allocation3 + $0x18] sm:$0x1] %v1446
    %1476 = vst [vmem:[#allocation3 + $0x20] sm:$0x1] %v1447
    %1477 = vst [vmem:[#allocation3 + $0x28] sm:$0x1] %v1448
    %1478 = vst [vmem:[#allocation3 + $0x30] sm:$0x1] %v1449
    %1479 = vst [vmem:[#allocation3 + $0x38] sm:$0x1] %v1450
    %1480 = vst [vmem:[#allocation3 + $0x40] sm:$0x1] %v1398
    %1481 = vst [vmem:[#allocation3 + $0x48] sm:$0x1] %v1451
    %1482 = vst [vmem:[#allocation3 + $0x50] sm:$0x1] %v1452
    %1483 = vst [vmem:[#allocation3 + $0x58] sm:$0x1] %v1453
    %1484 = vst [vmem:[#allocation3 + $0x60] sm:$0x1] %v1454
    %1485 = vst [vmem:[#allocation3 + $0x68] sm:$0x1] %v1455
    %1486 = vst [vmem:[#allocation3 + $0x70] sm:$0x1] %v1456
    %1487 = vst [vmem:[#allocation3 + $0x78] sm:$0x1] %v1457
    %v1490 = vrot.slane %v1401, 1
    %v1491 = vrot.slane %v1401, 2
    %v1492 = vrot.slane %v1401, 3
    %v1493 = vrot.slane %v1401, 4
    %v1494 = vrot.slane %v1401, 5
    %v1495 = vrot.slane %v1401, 6
    %v1496 = vrot.slane %v1401, 7
    %v1497 = vrot.slane %v1404, 1
    %v1498 = vrot.slane %v1404, 2
    %v1499 = vrot.slane %v1404, 3
    %v1500 = vrot.slane %v1404, 4
    %v1501 = vrot.slane %v1404, 5
    %v1502 = vrot.slane %v1404, 6
    %v1503 = vrot.slane %v1404, 7
    %1518 = vst [vmem:[#allocation3 + $0x1] sm:$0x1] %v1401
    %1519 = vst [vmem:[#allocation3 + $0x9] sm:$0x1] %v1490
    %1520 = vst [vmem:[#allocation3 + $0x11] sm:$0x1] %v1491
    %1521 = vst [vmem:[#allocation3 + $0x19] sm:$0x1] %v1492
    %1522 = vst [vmem:[#allocation3 + $0x21] sm:$0x1] %v1493
    %1523 = vst [vmem:[#allocation3 + $0x29] sm:$0x1] %v1494
    %1524 = vst [vmem:[#allocation3 + $0x31] sm:$0x1] %v1495
    %1525 = vst [vmem:[#allocation3 + $0x39] sm:$0x1] %v1496
    %1526 = vst [vmem:[#allocation3 + $0x41] sm:$0x1] %v1404
    %1527 = vst [vmem:[#allocation3 + $0x49] sm:$0x1] %v1497
    %1528 = vst [vmem:[#allocation3 + $0x51] sm:$0x1] %v1498
    %1529 = vst [vmem:[#allocation3 + $0x59] sm:$0x1] %v1499
    %1530 = vst [vmem:[#allocation3 + $0x61] sm:$0x1] %v1500
    %1531 = vst [vmem:[#allocation3 + $0x69] sm:$0x1] %v1501
    %1532 = vst [vmem:[#allocation3 + $0x71] sm:$0x1] %v1502
    %1533 = vst [vmem:[#allocation3 + $0x79] sm:$0x1] %v1503
    %v1536 = vrot.slane %v1407, 1
    %v1537 = vrot.slane %v1407, 2
    %v1538 = vrot.slane %v1407, 3
    %v1539 = vrot.slane %v1407, 4
    %v1540 = vrot.slane %v1407, 5
    %v1541 = vrot.slane %v1407, 6
    %v1542 = vrot.slane %v1407, 7
    %v1543 = vrot.slane %v1410, 1
    %v1544 = vrot.slane %v1410, 2
    %v1545 = vrot.slane %v1410, 3
    %v1546 = vrot.slane %v1410, 4
    %v1547 = vrot.slane %v1410, 5
    %v1548 = vrot.slane %v1410, 6
    %v1549 = vrot.slane %v1410, 7
    %1564 = vst [vmem:[#allocation3 + $0x2] sm:$0x1] %v1407
    %1565 = vst [vmem:[#allocation3 + $0xa] sm:$0x1] %v1536
    %1566 = vst [vmem:[#allocation3 + $0x12] sm:$0x1] %v1537
    %1567 = vst [vmem:[#allocation3 + $0x1a] sm:$0x1] %v1538
    %1568 = vst [vmem:[#allocation3 + $0x22] sm:$0x1] %v1539
    %1569 = vst [vmem:[#allocation3 + $0x2a] sm:$0x1] %v1540
    %1570 = vst [vmem:[#allocation3 + $0x32] sm:$0x1] %v1541
    %1571 = vst [vmem:[#allocation3 + $0x3a] sm:$0x1] %v1542
    %1572 = vst [vmem:[#allocation3 + $0x42] sm:$0x1] %v1410
    %1573 = vst [vmem:[#allocation3 + $0x4a] sm:$0x1] %v1543
    %1574 = vst [vmem:[#allocation3 + $0x52] sm:$0x1] %v1544
    %1575 = vst [vmem:[#allocation3 + $0x5a] sm:$0x1] %v1545
    %1576 = vst [vmem:[#allocation3 + $0x62] sm:$0x1] %v1546
    %1577 = vst [vmem:[#allocation3 + $0x6a] sm:$0x1] %v1547
    %1578 = vst [vmem:[#allocation3 + $0x72] sm:$0x1] %v1548
    %1579 = vst [vmem:[#allocation3 + $0x7a] sm:$0x1] %v1549
    %v1582 = vrot.slane %v1413, 1
    %v1583 = vrot.slane %v1413, 2
    %v1584 = vrot.slane %v1413, 3
    %v1585 = vrot.slane %v1413, 4
    %v1586 = vrot.slane %v1413, 5
    %v1587 = vrot.slane %v1413, 6
    %v1588 = vrot.slane %v1413, 7
    %v1589 = vrot.slane %v1416, 1
    %v1590 = vrot.slane %v1416, 2
    %v1591 = vrot.slane %v1416, 3
    %v1592 = vrot.slane %v1416, 4
    %v1593 = vrot.slane %v1416, 5
    %v1594 = vrot.slane %v1416, 6
    %v1595 = vrot.slane %v1416, 7
    %1610 = vst [vmem:[#allocation3 + $0x3] sm:$0x1] %v1413
    %1611 = vst [vmem:[#allocation3 + $0xb] sm:$0x1] %v1582
    %1612 = vst [vmem:[#allocation3 + $0x13] sm:$0x1] %v1583
    %1613 = vst [vmem:[#allocation3 + $0x1b] sm:$0x1] %v1584
    %1614 = vst [vmem:[#allocation3 + $0x23] sm:$0x1] %v1585
    %1615 = vst [vmem:[#allocation3 + $0x2b] sm:$0x1] %v1586
    %1616 = vst [vmem:[#allocation3 + $0x33] sm:$0x1] %v1587
    %1617 = vst [vmem:[#allocation3 + $0x3b] sm:$0x1] %v1588
    %1618 = vst [vmem:[#allocation3 + $0x43] sm:$0x1] %v1416
    %1619 = vst [vmem:[#allocation3 + $0x4b] sm:$0x1] %v1589
    %1620 = vst [vmem:[#allocation3 + $0x53] sm:$0x1] %v1590
    %1621 = vst [vmem:[#allocation3 + $0x5b] sm:$0x1] %v1591
    %1622 = vst [vmem:[#allocation3 + $0x63] sm:$0x1] %v1592
    %1623 = vst [vmem:[#allocation3 + $0x6b] sm:$0x1] %v1593
    %1624 = vst [vmem:[#allocation3 + $0x73] sm:$0x1] %v1594
    %1625 = vst [vmem:[#allocation3 + $0x7b] sm:$0x1] %v1595
    %v1628 = vrot.slane %v1419, 1
    %v1629 = vrot.slane %v1419, 2
    %v1630 = vrot.slane %v1419, 3
    %v1631 = vrot.slane %v1419, 4
    %v1632 = vrot.slane %v1419, 5
    %v1633 = vrot.slane %v1419, 6
    %v1634 = vrot.slane %v1419, 7
    %v1635 = vrot.slane %v1422, 1
    %v1636 = vrot.slane %v1422, 2
    %v1637 = vrot.slane %v1422, 3
    %v1638 = vrot.slane %v1422, 4
    %v1639 = vrot.slane %v1422, 5
    %v1640 = vrot.slane %v1422, 6
    %v1641 = vrot.slane %v1422, 7
    %1656 = vst [vmem:[#allocation3 + $0x4] sm:$0x1] %v1419
    %1657 = vst [vmem:[#allocation3 + $0xc] sm:$0x1] %v1628
    %1658 = vst [vmem:[#allocation3 + $0x14] sm:$0x1] %v1629
    %1659 = vst [vmem:[#allocation3 + $0x1c] sm:$0x1] %v1630
    %1660 = vst [vmem:[#allocation3 + $0x24] sm:$0x1] %v1631
    %1661 = vst [vmem:[#allocation3 + $0x2c] sm:$0x1] %v1632
    %1662 = vst [vmem:[#allocation3 + $0x34] sm:$0x1] %v1633
    %1663 = vst [vmem:[#allocation3 + $0x3c] sm:$0x1] %v1634
    %1664 = vst [vmem:[#allocation3 + $0x44] sm:$0x1] %v1422
    %1665 = vst [vmem:[#allocation3 + $0x4c] sm:$0x1] %v1635
    %1666 = vst [vmem:[#allocation3 + $0x54] sm:$0x1] %v1636
    %1667 = vst [vmem:[#allocation3 + $0x5c] sm:$0x1] %v1637
    %1668 = vst [vmem:[#allocation3 + $0x64] sm:$0x1] %v1638
    %1669 = vst [vmem:[#allocation3 + $0x6c] sm:$0x1] %v1639
    %1670 = vst [vmem:[#allocation3 + $0x74] sm:$0x1] %v1640
    %1671 = vst [vmem:[#allocation3 + $0x7c] sm:$0x1] %v1641
    %v1674 = vrot.slane %v1425, 1
    %v1675 = vrot.slane %v1425, 2
    %v1676 = vrot.slane %v1425, 3
    %v1677 = vrot.slane %v1425, 4
    %v1678 = vrot.slane %v1425, 5
    %v1679 = vrot.slane %v1425, 6
    %v1680 = vrot.slane %v1425, 7
    %v1681 = vrot.slane %v1428, 1
    %v1682 = vrot.slane %v1428, 2
    %v1683 = vrot.slane %v1428, 3
    %v1684 = vrot.slane %v1428, 4
    %v1685 = vrot.slane %v1428, 5
    %v1686 = vrot.slane %v1428, 6
    %v1687 = vrot.slane %v1428, 7
    %1702 = vst [vmem:[#allocation3 + $0x5] sm:$0x1] %v1425
    %1703 = vst [vmem:[#allocation3 + $0xd] sm:$0x1] %v1674
    %1704 = vst [vmem:[#allocation3 + $0x15] sm:$0x1] %v1675
    %1705 = vst [vmem:[#allocation3 + $0x1d] sm:$0x1] %v1676
    %1706 = vst [vmem:[#allocation3 + $0x25] sm:$0x1] %v1677
    %1707 = vst [vmem:[#allocation3 + $0x2d] sm:$0x1] %v1678
    %1708 = vst [vmem:[#allocation3 + $0x35] sm:$0x1] %v1679
    %1709 = vst [vmem:[#allocation3 + $0x3d] sm:$0x1] %v1680
    %1710 = vst [vmem:[#allocation3 + $0x45] sm:$0x1] %v1428
    %1711 = vst [vmem:[#allocation3 + $0x4d] sm:$0x1] %v1681
    %1712 = vst [vmem:[#allocation3 + $0x55] sm:$0x1] %v1682
    %1713 = vst [vmem:[#allocation3 + $0x5d] sm:$0x1] %v1683
    %1714 = vst [vmem:[#allocation3 + $0x65] sm:$0x1] %v1684
    %1715 = vst [vmem:[#allocation3 + $0x6d] sm:$0x1] %v1685
    %1716 = vst [vmem:[#allocation3 + $0x75] sm:$0x1] %v1686
    %1717 = vst [vmem:[#allocation3 + $0x7d] sm:$0x1] %v1687
    %v1720 = vrot.slane %v1431, 1
    %v1721 = vrot.slane %v1431, 2
    %v1722 = vrot.slane %v1431, 3
    %v1723 = vrot.slane %v1431, 4
    %v1724 = vrot.slane %v1431, 5
    %v1725 = vrot.slane %v1431, 6
    %v1726 = vrot.slane %v1431, 7
    %v1727 = vrot.slane %v1434, 1
    %v1728 = vrot.slane %v1434, 2
    %v1729 = vrot.slane %v1434, 3
    %v1730 = vrot.slane %v1434, 4
    %v1731 = vrot.slane %v1434, 5
    %v1732 = vrot.slane %v1434, 6
    %v1733 = vrot.slane %v1434, 7
    %1748 = vst [vmem:[#allocation3 + $0x6] sm:$0x1] %v1431
    %1749 = vst [vmem:[#allocation3 + $0xe] sm:$0x1] %v1720
    %1750 = vst [vmem:[#allocation3 + $0x16] sm:$0x1] %v1721
    %1751 = vst [vmem:[#allocation3 + $0x1e] sm:$0x1] %v1722
    %1752 = vst [vmem:[#allocation3 + $0x26] sm:$0x1] %v1723
    %1753 = vst [vmem:[#allocation3 + $0x2e] sm:$0x1] %v1724
    %1754 = vst [vmem:[#allocation3 + $0x36] sm:$0x1] %v1725
    %1755 = vst [vmem:[#allocation3 + $0x3e] sm:$0x1] %v1726
    %1756 = vst [vmem:[#allocation3 + $0x46] sm:$0x1] %v1434
    %1757 = vst [vmem:[#allocation3 + $0x4e] sm:$0x1] %v1727
    %1758 = vst [vmem:[#allocation3 + $0x56] sm:$0x1] %v1728
    %1759 = vst [vmem:[#allocation3 + $0x5e] sm:$0x1] %v1729
    %1760 = vst [vmem:[#allocation3 + $0x66] sm:$0x1] %v1730
    %1761 = vst [vmem:[#allocation3 + $0x6e] sm:$0x1] %v1731
    %1762 = vst [vmem:[#allocation3 + $0x76] sm:$0x1] %v1732
    %1763 = vst [vmem:[#allocation3 + $0x7e] sm:$0x1] %v1733
    %v1766 = vrot.slane %v1437, 1
    %v1767 = vrot.slane %v1437, 2
    %v1768 = vrot.slane %v1437, 3
    %v1769 = vrot.slane %v1437, 4
    %v1770 = vrot.slane %v1437, 5
    %v1771 = vrot.slane %v1437, 6
    %v1772 = vrot.slane %v1437, 7
    %v1773 = vrot.slane %v1440, 1
    %v1774 = vrot.slane %v1440, 2
    %v1775 = vrot.slane %v1440, 3
    %v1776 = vrot.slane %v1440, 4
    %v1777 = vrot.slane %v1440, 5
    %v1778 = vrot.slane %v1440, 6
    %v1779 = vrot.slane %v1440, 7
    %1794 = vst [vmem:[#allocation3 + $0x7] sm:$0x1] %v1437
    %1795 = vst [vmem:[#allocation3 + $0xf] sm:$0x1] %v1766
    %1796 = vst [vmem:[#allocation3 + $0x17] sm:$0x1] %v1767
    %1797 = vst [vmem:[#allocation3 + $0x1f] sm:$0x1] %v1768
    %1798 = vst [vmem:[#allocation3 + $0x27] sm:$0x1] %v1769
    %1799 = vst [vmem:[#allocation3 + $0x2f] sm:$0x1] %v1770
    %1800 = vst [vmem:[#allocation3 + $0x37] sm:$0x1] %v1771
    %1801 = vst [vmem:[#allocation3 + $0x3f] sm:$0x1] %v1772
    %1802 = vst [vmem:[#allocation3 + $0x47] sm:$0x1] %v1440
    %1803 = vst [vmem:[#allocation3 + $0x4f] sm:$0x1] %v1773
    %1804 = vst [vmem:[#allocation3 + $0x57] sm:$0x1] %v1774
    %1805 = vst [vmem:[#allocation3 + $0x5f] sm:$0x1] %v1775
    %1806 = vst [vmem:[#allocation3 + $0x67] sm:$0x1] %v1776
    %1807 = vst [vmem:[#allocation3 + $0x6f] sm:$0x1] %v1777
    %1808 = vst [vmem:[#allocation3 + $0x77] sm:$0x1] %v1778
    %1809 = vst [vmem:[#allocation3 + $0x7f] sm:$0x1] %v1779
    // Predicated region
    $region14: #{tpu_custom_call.1} parent=1 // pred_check
      _
    $region15: #{tpu_custom_call.1} parent=1 // pred_check_branch
      %1811 = sbr.rel (0) target = $region17
    $region16: #{tpu_custom_call.1} parent=1 // pred_region
      %1813 = vsyncadd [#allocation4], 0
      %s1814 = sshll.u32 [#allocation3], 4
      %s1815 = int_to_ptr.vmem [resolvable:$true] %s1814
      %s1816 = sshll.u32 %s3, 4
      %s1817 = int_to_ptr.hbm [resolvable:$true] %s1816
      %1822 = dma.vmem_to_hbm [thread:$0]  %s1815, 2048, %s1817, [#allocation4], 128, 128, 8
    $region17: #{tpu_custom_call.1} parent=1 // pred_fallthru
      _
    // Predicated region
    $region18: #{tpu_custom_call.1} parent=1 // pred_check
      _
    $region19: #{tpu_custom_call.1} parent=1 // pred_check_branch
      %1824 = sbr.rel (0) target = $region21
    $region20: #{tpu_custom_call.1} parent=1 // pred_region
      %1826 = dma.done [#allocation4], 2048
    $region21: #{tpu_custom_call.1} parent=1 // pred_fallthru
      _
    %1827 = vsyncpa [#allocation4], 1

</llo_original>
